<compile_context>
chip_gen: v6e
topology: v6e:2x2x1
jax: 0.10.0
libtpu: 0.0.40
codegen_flags: <defaults>
</compile_context>

<pallas_src>
import functools

import jax
import jax.numpy as jnp
from jax.experimental import pallas as pl
from jax.experimental.pallas import tpu as pltpu

EPS = 1e-5


# ----------------------------------------------------------------------------
# Kernels (packed layout: rows = H, cols = W*C, one image per grid step)
# ----------------------------------------------------------------------------
def _conv3x3_banded(xin, w_ref, y_ref, s_ref, sq_ref, pad_ref):
    """3x3 conv body on one image in packed (H, W*Cin) layout.

    xin    : (H, W*Cin) value          -- conv input, channels minor
    w_ref  : (3, W*Cin, W*Cout)        -- banded per-kh weight matrices
    y_ref  : (1, H, W*Cout)            -- conv output
    s_ref  : (1, 1, W*Cout)            -- per-image partial sum (over H)
    sq_ref : (1, 1, W*Cout)            -- per-image partial sum of squares
    pad_ref: (H+2, W*Cin) VMEM scratch -- H-halo zero padding only
    """
    H = xin.shape[0]
    zero_row = jnp.zeros((1, pad_ref.shape[1]), pad_ref.dtype)
    # Only the two halo rows are zeroed; interior is a single full-width store.
    pad_ref[0:1, :] = zero_row
    pad_ref[H + 1:H + 2, :] = zero_row
    pad_ref[1:H + 1, :] = xin

    # kw taps + W-padding are folded into the banded matrices -> 3 dense dots
    # with K = W*Cin (lane dense), instead of 9 dots with K = Cin.
    acc = jnp.dot(pad_ref[0:H, :], w_ref[0], preferred_element_type=jnp.float32)
    acc = acc + jnp.dot(pad_ref[1:H + 1, :], w_ref[1],
                        preferred_element_type=jnp.float32)
    acc = acc + jnp.dot(pad_ref[2:H + 2, :], w_ref[2],
                        preferred_element_type=jnp.float32)

    y_ref[0] = acc
    # One-pass partial statistics (reduced over H here; over N, W in XLA).
    s_ref[0] = jnp.sum(acc, axis=0, keepdims=True)
    sq_ref[0] = jnp.sum(acc * acc, axis=0, keepdims=True)


def conv1_kernel(x_ref, w_ref, y_ref, s_ref, sq_ref, pad_ref):
    _conv3x3_banded(x_ref[0], w_ref, y_ref, s_ref, sq_ref, pad_ref)


def conv2_kernel(y1_ref, sc_ref, sh_ref, w_ref, y_ref, s_ref, sq_ref, pad_ref):
    # bn1 (precomputed per-channel scale/shift, tiled over W) + relu, fused.
    a = jnp.maximum(y1_ref[0] * sc_ref[...] + sh_ref[...], 0.0)
    _conv3x3_banded(a, w_ref, y_ref, s_ref, sq_ref, pad_ref)


def bn2_residual_kernel(y2_ref, x_ref, sc_ref, sh_ref, o_ref):
    # bn2 + residual add + relu, all lane-dense elementwise.
    o_ref[0] = jnp.maximum(y2_ref[0] * sc_ref[...] + sh_ref[...] + x_ref[0],
                           0.0)


# ----------------------------------------------------------------------------
# Wrapper
# ----------------------------------------------------------------------------
def _banded_weights(w_oihw, W):
    """Fold the 3 kw taps (and W zero-padding) into (3, W*Cin, W*Cout)."""
    wt = jnp.transpose(w_oihw, (2, 3, 1, 0)).astype(jnp.float32)  # (kh,kw,Ci,Co)
    idx = jnp.arange(W)
    mats = []
    for kh in range(3):
        acc = None
        for kw in range(3):
            d = kw - 1  # input col w = output col w' + d; OOB cols stay zero.
            band = (idx[:, None] == (idx[None, :] + d)).astype(jnp.float32)
            blk = jnp.kron(band, wt[kh, kw])  # (W*Cin, W*Cout)
            acc = blk if acc is None else acc + blk
        mats.append(acc)
    return jnp.stack(mats, axis=0)


@jax.jit
def basic_block_forward(x_nchw, w1_oihw, g1, b1, w2_oihw, g2, b2):
    """x_nchw: [N, C, H, W] f32 (PyTorch layout). Returns NCHW f32."""
    N, Cin, H, W = x_nchw.shape
    Cout = w1_oihw.shape[0]
    assert Cin == Cout, "identity residual requires Cin == Cout (no downsample)"
    WCi, WCo = W * Cin, W * Cout

    # Pack to lane-dense (N, H, W*C); channels minor.
    xp = jnp.transpose(x_nchw, (0, 2, 3, 1)).reshape(N, H, WCi)
    w1b = _banded_weights(w1_oihw, W)  # (3, WCi, WCo)
    w2b = _banded_weights(w2_oihw, W)  # (3, WCo, WCo)

    cparams = pltpu.CompilerParams(
        dimension_semantics=("parallel",),
        vmem_limit_bytes=32 * 1024 * 1024)

    # ---- pass 1: conv1 + per-image partial stats -----------------------------
    y1, s1, q1 = pl.pallas_call(
        conv1_kernel,
        out_shape=(
            jax.ShapeDtypeStruct((N, H, WCo), jnp.float32),
            jax.ShapeDtypeStruct((N, 1, WCo), jnp.float32),
            jax.ShapeDtypeStruct((N, 1, WCo), jnp.float32),
        ),
        grid=(N,),
        in_specs=[
            pl.BlockSpec((1, H, WCi), lambda n: (n, 0, 0)),
            pl.BlockSpec((3, WCi, WCo), lambda n: (0, 0, 0)),
        ],
        out_specs=(
            pl.BlockSpec((1, H, WCo), lambda n: (n, 0, 0)),
            pl.BlockSpec((1, 1, WCo), lambda n: (n, 0, 0)),
            pl.BlockSpec((1, 1, WCo), lambda n: (n, 0, 0)),
        ),
        scratch_shapes=[pltpu.VMEM((H + 2, WCi), jnp.float32)],
        compiler_params=cparams,
    )(xp, w1b)

    inv_cnt = 1.0 / float(N * H * W)

    def finalize(s, q, gamma, beta):
        # Global (N, H, W) statistics from per-image partials (tiny XLA op).
        mean = jnp.sum(s.reshape(N, W, Cout), axis=(0, 1)) * inv_cnt
        ex2 = jnp.sum(q.reshape(N, W, Cout), axis=(0, 1)) * inv_cnt
        var = ex2 - mean * mean
        scale = gamma * jax.lax.rsqrt(var + EPS)
        shift = beta - mean * scale
        # Tile per-channel affine over W so it applies directly in packed layout.
        return (jnp.tile(scale, W).reshape(1, WCo),
                jnp.tile(shift, W).reshape(1, WCo))

    sc1, sh1 = finalize(s1, q1, g1, b1)

    # ---- pass 2: bn1 + relu + conv2 + per-image partial stats ----------------
    y2, s2, q2 = pl.pallas_call(
        conv2_kernel,
        out_shape=(
            jax.ShapeDtypeStruct((N, H, WCo), jnp.float32),
            jax.ShapeDtypeStruct((N, 1, WCo), jnp.float32),
            jax.ShapeDtypeStruct((N, 1, WCo), jnp.float32),
        ),
        grid=(N,),
        in_specs=[
            pl.BlockSpec((1, H, WCo), lambda n: (n, 0, 0)),
            pl.BlockSpec((1, WCo), lambda n: (0, 0)),
            pl.BlockSpec((1, WCo), lambda n: (0, 0)),
            pl.BlockSpec((3, WCo, WCo), lambda n: (0, 0, 0)),
        ],
        out_specs=(
            pl.BlockSpec((1, H, WCo), lambda n: (n, 0, 0)),
            pl.BlockSpec((1, 1, WCo), lambda n: (n, 0, 0)),
            pl.BlockSpec((1, 1, WCo), lambda n: (n, 0, 0)),
        ),
        scratch_shapes=[pltpu.VMEM((H + 2, WCo), jnp.float32)],
        compiler_params=cparams,
    )(y1, sc1, sh1, w2b)

    sc2, sh2 = finalize(s2, q2, g2, b2)

    # ---- pass 3: bn2 + residual add + relu ------------------------------------
    out_p = pl.pallas_call(
        bn2_residual_kernel,
        out_shape=jax.ShapeDtypeStruct((N, H, WCo), jnp.float32),
        grid=(N,),
        in_specs=[
            pl.BlockSpec((1, H, WCo), lambda n: (n, 0, 0)),
            pl.BlockSpec((1, H, WCi), lambda n: (n, 0, 0)),
            pl.BlockSpec((1, WCo), lambda n: (0, 0)),
            pl.BlockSpec((1, WCo), lambda n: (0, 0)),
        ],
        out_specs=pl.BlockSpec((1, H, WCo), lambda n: (n, 0, 0)),
        compiler_params=cparams,
    )(y2, xp, sc2, sh2)

    # Unpack (N, H, W*C) -> NCHW at the PyTorch interface boundary.
    return jnp.transpose(out_p.reshape(N, H, W, Cout), (0, 3, 1, 2))


# ----------------------------------------------------------------------------
# Pure-JAX reference (matches PyTorch NCHW, training-mode BN)
# ----------------------------------------------------------------------------
def reference_forward(x, w1_oihw, g1, b1, w2_oihw, g2, b2):
    def conv(x, w):
        return jax.lax.conv_general_dilated(
            x, w, window_strides=(1, 1), padding=((1, 1), (1, 1)),
            dimension_numbers=("NCHW", "OIHW", "NCHW"))

    def bn(x, g, b):
        m = jnp.mean(x, axis=(0, 2, 3), keepdims=True)
        v = jnp.mean((x - m) ** 2, axis=(0, 2, 3), keepdims=True)
        return ((x - m) * jax.lax.rsqrt(v + EPS) * g.reshape(1, -1, 1, 1)
                + b.reshape(1, -1, 1, 1))

    out = jnp.maximum(bn(conv(x, w1_oihw), g1, b1), 0.0)
    out = bn(conv(out, w2_oihw), g2, b2)
    return jnp.maximum(out + x, 0.0)


if __name__ == "__main__":
    # Small deterministic problem: N=2, C_in=C_out=8, H=W=16 (stride=1).
    # W*C = 128 -> exactly one lane-width in the packed layout.
    N, C, H, W = 2, 8, 16, 16
    key = jax.random.PRNGKey(0)
    kx, kw1, kw2, kg1, kb1, kg2, kb2 = jax.random.split(key, 7)

    x = jax.random.normal(kx, (N, C, H, W), jnp.float32)

    # Conv weights in PyTorch OIHW shape [Cout, Cin, 3, 3] (bias=False).
    w1_oihw = jax.random.normal(kw1, (C, C, 3, 3), jnp.float32) * 0.1
    w2_oihw = jax.random.normal(kw2, (C, C, 3, 3), jnp.float32) * 0.1
    # BN affine params (deterministic, non-trivial).
    g1 = 1.0 + 0.1 * jax.random.normal(kg1, (C,), jnp.float32)
    b1 = 0.1 * jax.random.normal(kb1, (C,), jnp.float32)
    g2 = 1.0 + 0.1 * jax.random.normal(kg2, (C,), jnp.float32)
    b2 = 0.1 * jax.random.normal(kb2, (C,), jnp.float32)

    out = basic_block_forward(x, w1_oihw, g1, b1, w2_oihw, g2, b2)
    out = jax.block_until_ready(out)

    ref = reference_forward(x, w1_oihw, g1, b1, w2_oihw, g2, b2)
    ref = jax.block_until_ready(ref)

    assert out.shape == (N, C, H, W)
    max_err = float(jnp.max(jnp.abs(out - ref)))
    assert jnp.allclose(out, ref, atol=2e-3, rtol=2e-3), (
        f"max abs err {max_err}")

    print("KERNEL_OK")
</pallas_src>

<mosaic_0001>
module attributes {stable_mosaic.version = 11 : i64} {
  func.func @conv1_kernel(%arg0: i32, %arg1: memref<1x16x128xf32, #tpu.memory_space<vmem>>, %arg2: memref<3x128x128xf32, #tpu.memory_space<vmem>>, %arg3: memref<1x16x128xf32, #tpu.memory_space<vmem>>, %arg4: memref<1x1x128xf32, #tpu.memory_space<vmem>>, %arg5: memref<1x1x128xf32, #tpu.memory_space<vmem>>, %arg6: memref<18x128xf32, #tpu.memory_space<vmem>>) attributes {dimension_semantics = [#tpu.dimension_semantics<parallel>], iteration_bounds = array<i64: 2>, scalar_prefetch = 0 : i64, scratch_operands = 1 : i64, tpu.core_type = #tpu.core_type<tc>, window_params = [{transform_indices = @transform_0, window_bounds = array<i64: 1, 16, 128>}, {pipeline_mode = #tpu.pipeline_mode<synchronous>, transform_indices = @transform_1, window_bounds = array<i64: 3, 128, 128>}, {transform_indices = @transform_2, window_bounds = array<i64: 1, 16, 128>}, {transform_indices = @transform_3, window_bounds = array<i64: 1, 1, 128>}, {transform_indices = @transform_4, window_bounds = array<i64: 1, 1, 128>}]} {
    %c0 = arith.constant 0 : index
    %c0_0 = arith.constant 0 : index
    %c0_1 = arith.constant 0 : index
    %0 = vector.load %arg1[%c0, %c0_0, %c0_1] : memref<1x16x128xf32, #tpu.memory_space<vmem>>, vector<1x16x128xf32>
    %1 = vector.shape_cast %0 : vector<1x16x128xf32> to vector<16x128xf32>
    %cst = arith.constant 0.000000e+00 : f32
    %2 = vector.broadcast %cst : f32 to vector<1x128xf32>
    %c0_2 = arith.constant 0 : index
    %c0_3 = arith.constant 0 : index
    %3 = vector.load %arg6[%c0_2, %c0_3] : memref<18x128xf32, #tpu.memory_space<vmem>>, vector<1x128xf32>
    tpu.vector_store %arg6[%c0_2, %c0_3], %2 {strides = array<i32>} : memref<18x128xf32, #tpu.memory_space<vmem>>, vector<1x128xf32>,
    %c17 = arith.constant 17 : index
    %c0_4 = arith.constant 0 : index
    %4 = vector.load %arg6[%c17, %c0_4] : memref<18x128xf32, #tpu.memory_space<vmem>>, vector<1x128xf32>
    tpu.vector_store %arg6[%c17, %c0_4], %2 {strides = array<i32>} : memref<18x128xf32, #tpu.memory_space<vmem>>, vector<1x128xf32>,
    %c1 = arith.constant 1 : index
    %c0_5 = arith.constant 0 : index
    %5 = vector.load %arg6[%c1, %c0_5] : memref<18x128xf32, #tpu.memory_space<vmem>>, vector<16x128xf32>
    tpu.vector_store %arg6[%c1, %c0_5], %1 {strides = array<i32>} : memref<18x128xf32, #tpu.memory_space<vmem>>, vector<16x128xf32>,
    %c0_6 = arith.constant 0 : index
    %c0_7 = arith.constant 0 : index
    %6 = vector.load %arg6[%c0_6, %c0_7] : memref<18x128xf32, #tpu.memory_space<vmem>>, vector<16x128xf32>
    %c0_8 = arith.constant 0 : index
    %c0_9 = arith.constant 0 : index
    %c0_10 = arith.constant 0 : index
    %7 = vector.load %arg2[%c0_8, %c0_9, %c0_10] : memref<3x128x128xf32, #tpu.memory_space<vmem>>, vector<1x128x128xf32>
    %8 = vector.shape_cast %7 : vector<1x128x128xf32> to vector<128x128xf32>
    %cst_11 = arith.constant dense<0.000000e+00> : vector<16x128xf32>
    %9 = tpu.matmul %6, %8, %cst_11 {dimension_numbers = #tpu.dot_dimension_numbers<[1], [0], [0], [1], [0, 0, 1, 1], [], []>} : vector<16x128xf32>, vector<128x128xf32>, vector<16x128xf32> -> vector<16x128xf32>
    %c1_12 = arith.constant 1 : index
    %c0_13 = arith.constant 0 : index
    %10 = vector.load %arg6[%c1_12, %c0_13] : memref<18x128xf32, #tpu.memory_space<vmem>>, vector<16x128xf32>
    %c1_14 = arith.constant 1 : index
    %c0_15 = arith.constant 0 : index
    %c0_16 = arith.constant 0 : index
    %11 = vector.load %arg2[%c1_14, %c0_15, %c0_16] : memref<3x128x128xf32, #tpu.memory_space<vmem>>, vector<1x128x128xf32>
    %12 = vector.shape_cast %11 : vector<1x128x128xf32> to vector<128x128xf32>
    %cst_17 = arith.constant dense<0.000000e+00> : vector<16x128xf32>
    %13 = tpu.matmul %10, %12, %cst_17 {dimension_numbers = #tpu.dot_dimension_numbers<[1], [0], [0], [1], [0, 0, 1, 1], [], []>} : vector<16x128xf32>, vector<128x128xf32>, vector<16x128xf32> -> vector<16x128xf32>
    %14 = arith.addf %9, %13 : vector<16x128xf32>
    %c2 = arith.constant 2 : index
    %c0_18 = arith.constant 0 : index
    %15 = vector.load %arg6[%c2, %c0_18] : memref<18x128xf32, #tpu.memory_space<vmem>>, vector<16x128xf32>
    %c2_19 = arith.constant 2 : index
    %c0_20 = arith.constant 0 : index
    %c0_21 = arith.constant 0 : index
    %16 = vector.load %arg2[%c2_19, %c0_20, %c0_21] : memref<3x128x128xf32, #tpu.memory_space<vmem>>, vector<1x128x128xf32>
    %17 = vector.shape_cast %16 : vector<1x128x128xf32> to vector<128x128xf32>
    %cst_22 = arith.constant dense<0.000000e+00> : vector<16x128xf32>
    %18 = tpu.matmul %15, %17, %cst_22 {dimension_numbers = #tpu.dot_dimension_numbers<[1], [0], [0], [1], [0, 0, 1, 1], [], []>} : vector<16x128xf32>, vector<128x128xf32>, vector<16x128xf32> -> vector<16x128xf32>
    %19 = arith.addf %14, %18 : vector<16x128xf32>
    %c0_23 = arith.constant 0 : index
    %c0_24 = arith.constant 0 : index
    %c0_25 = arith.constant 0 : index
    %20 = vector.load %arg3[%c0_23, %c0_24, %c0_25] : memref<1x16x128xf32, #tpu.memory_space<vmem>>, vector<1x16x128xf32>
    %21 = vector.shape_cast %20 : vector<1x16x128xf32> to vector<16x128xf32>
    %22 = vector.shape_cast %19 : vector<16x128xf32> to vector<1x16x128xf32>
    tpu.vector_store %arg3[%c0_23, %c0_24, %c0_25], %22 {strides = array<i32>} : memref<1x16x128xf32, #tpu.memory_space<vmem>>, vector<1x16x128xf32>,
    %cst_26 = arith.constant dense<0.000000e+00> : vector<128xf32>
    %23 = vector.multi_reduction <add>, %19, %cst_26 [0] : vector<16x128xf32> to vector<128xf32>
    %24 = vector.shape_cast %23 : vector<128xf32> to vector<1x128xf32>
    %c0_27 = arith.constant 0 : index
    %c0_28 = arith.constant 0 : index
    %c0_29 = arith.constant 0 : index
    %25 = vector.load %arg4[%c0_27, %c0_28, %c0_29] : memref<1x1x128xf32, #tpu.memory_space<vmem>>, vector<1x1x128xf32>
    %26 = vector.shape_cast %25 : vector<1x1x128xf32> to vector<1x128xf32>
    %27 = vector.shape_cast %24 : vector<1x128xf32> to vector<1x1x128xf32>
    tpu.vector_store %arg4[%c0_27, %c0_28, %c0_29], %27 {strides = array<i32>} : memref<1x1x128xf32, #tpu.memory_space<vmem>>, vector<1x1x128xf32>,
    %28 = arith.mulf %19, %19 : vector<16x128xf32>
    %cst_30 = arith.constant dense<0.000000e+00> : vector<128xf32>
    %29 = vector.multi_reduction <add>, %28, %cst_30 [0] : vector<16x128xf32> to vector<128xf32>
    %30 = vector.shape_cast %29 : vector<128xf32> to vector<1x128xf32>
    %c0_31 = arith.constant 0 : index
    %c0_32 = arith.constant 0 : index
    %c0_33 = arith.constant 0 : index
    %31 = vector.load %arg5[%c0_31, %c0_32, %c0_33] : memref<1x1x128xf32, #tpu.memory_space<vmem>>, vector<1x1x128xf32>
    %32 = vector.shape_cast %31 : vector<1x1x128xf32> to vector<1x128xf32>
    %33 = vector.shape_cast %30 : vector<1x128xf32> to vector<1x1x128xf32>
    tpu.vector_store %arg5[%c0_31, %c0_32, %c0_33], %33 {strides = array<i32>} : memref<1x1x128xf32, #tpu.memory_space<vmem>>, vector<1x1x128xf32>,
    return
  }
  func.func @transform_0(%arg0: i32) -> (i32, i32, i32) {
    %c0_i32 = arith.constant 0 : i32
    %c0_i32_0 = arith.constant 0 : i32
    %c0_i32_1 = arith.constant 0 : i32
    return %arg0, %c0_i32, %c0_i32_0 : i32, i32, i32
  }
  func.func @transform_1(%arg0: i32) -> (i32, i32, i32) {
    %c0_i32 = arith.constant 0 : i32
    %c0_i32_0 = arith.constant 0 : i32
    %c0_i32_1 = arith.constant 0 : i32
    %c0_i32_2 = arith.constant 0 : i32
    return %c0_i32, %c0_i32_0, %c0_i32_1 : i32, i32, i32
  }
  func.func @transform_2(%arg0: i32) -> (i32, i32, i32) {
    %c0_i32 = arith.constant 0 : i32
    %c0_i32_0 = arith.constant 0 : i32
    %c0_i32_1 = arith.constant 0 : i32
    return %arg0, %c0_i32, %c0_i32_0 : i32, i32, i32
  }
  func.func @transform_3(%arg0: i32) -> (i32, i32, i32) {
    %c0_i32 = arith.constant 0 : i32
    %c0_i32_0 = arith.constant 0 : i32
    %c0_i32_1 = arith.constant 0 : i32
    return %arg0, %c0_i32, %c0_i32_0 : i32, i32, i32
  }
  func.func @transform_4(%arg0: i32) -> (i32, i32, i32) {
    %c0_i32 = arith.constant 0 : i32
    %c0_i32_0 = arith.constant 0 : i32
    %c0_i32_1 = arith.constant 0 : i32
    return %arg0, %c0_i32, %c0_i32_0 : i32, i32, i32
  }
}

module attributes {stable_mosaic.version = 11 : i64} {
  func.func @conv2_kernel(%arg0: i32, %arg1: memref<1x16x128xf32, #tpu.memory_space<vmem>>, %arg2: memref<1x128xf32, #tpu.memory_space<vmem>>, %arg3: memref<1x128xf32, #tpu.memory_space<vmem>>, %arg4: memref<3x128x128xf32, #tpu.memory_space<vmem>>, %arg5: memref<1x16x128xf32, #tpu.memory_space<vmem>>, %arg6: memref<1x1x128xf32, #tpu.memory_space<vmem>>, %arg7: memref<1x1x128xf32, #tpu.memory_space<vmem>>, %arg8: memref<18x128xf32, #tpu.memory_space<vmem>>) attributes {dimension_semantics = [#tpu.dimension_semantics<parallel>], iteration_bounds = array<i64: 2>, scalar_prefetch = 0 : i64, scratch_operands = 1 : i64, tpu.core_type = #tpu.core_type<tc>, window_params = [{transform_indices = @transform_0, window_bounds = array<i64: 1, 16, 128>}, {pipeline_mode = #tpu.pipeline_mode<synchronous>, transform_indices = @transform_1, window_bounds = array<i64: 1, 128>}, {pipeline_mode = #tpu.pipeline_mode<synchronous>, transform_indices = @transform_2, window_bounds = array<i64: 1, 128>}, {pipeline_mode = #tpu.pipeline_mode<synchronous>, transform_indices = @transform_3, window_bounds = array<i64: 3, 128, 128>}, {transform_indices = @transform_4, window_bounds = array<i64: 1, 16, 128>}, {transform_indices = @transform_5, window_bounds = array<i64: 1, 1, 128>}, {transform_indices = @transform_6, window_bounds = array<i64: 1, 1, 128>}]} {
    %c0 = arith.constant 0 : index
    %c0_0 = arith.constant 0 : index
    %c0_1 = arith.constant 0 : index
    %0 = vector.load %arg1[%c0, %c0_0, %c0_1] : memref<1x16x128xf32, #tpu.memory_space<vmem>>, vector<1x16x128xf32>
    %1 = vector.shape_cast %0 : vector<1x16x128xf32> to vector<16x128xf32>
    %c0_2 = arith.constant 0 : index
    %c0_3 = arith.constant 0 : index
    %2 = vector.load %arg2[%c0_2, %c0_3] : memref<1x128xf32, #tpu.memory_space<vmem>>, vector<1x128xf32>
    %3 = vector.broadcast %2 : vector<1x128xf32> to vector<16x128xf32>
    %4 = arith.mulf %1, %3 : vector<16x128xf32>
    %c0_4 = arith.constant 0 : index
    %c0_5 = arith.constant 0 : index
    %5 = vector.load %arg3[%c0_4, %c0_5] : memref<1x128xf32, #tpu.memory_space<vmem>>, vector<1x128xf32>
    %6 = vector.broadcast %5 : vector<1x128xf32> to vector<16x128xf32>
    %7 = arith.addf %4, %6 : vector<16x128xf32>
    %cst = arith.constant 0.000000e+00 : f32
    %8 = vector.broadcast %cst : f32 to vector<16x128xf32>
    %9 = arith.maximumf %7, %8 : vector<16x128xf32>
    %cst_6 = arith.constant 0.000000e+00 : f32
    %10 = vector.broadcast %cst_6 : f32 to vector<1x128xf32>
    %c0_7 = arith.constant 0 : index
    %c0_8 = arith.constant 0 : index
    %11 = vector.load %arg8[%c0_7, %c0_8] : memref<18x128xf32, #tpu.memory_space<vmem>>, vector<1x128xf32>
    tpu.vector_store %arg8[%c0_7, %c0_8], %10 {strides = array<i32>} : memref<18x128xf32, #tpu.memory_space<vmem>>, vector<1x128xf32>,
    %c17 = arith.constant 17 : index
    %c0_9 = arith.constant 0 : index
    %12 = vector.load %arg8[%c17, %c0_9] : memref<18x128xf32, #tpu.memory_space<vmem>>, vector<1x128xf32>
    tpu.vector_store %arg8[%c17, %c0_9], %10 {strides = array<i32>} : memref<18x128xf32, #tpu.memory_space<vmem>>, vector<1x128xf32>,
    %c1 = arith.constant 1 : index
    %c0_10 = arith.constant 0 : index
    %13 = vector.load %arg8[%c1, %c0_10] : memref<18x128xf32, #tpu.memory_space<vmem>>, vector<16x128xf32>
    tpu.vector_store %arg8[%c1, %c0_10], %9 {strides = array<i32>} : memref<18x128xf32, #tpu.memory_space<vmem>>, vector<16x128xf32>,
    %c0_11 = arith.constant 0 : index
    %c0_12 = arith.constant 0 : index
    %14 = vector.load %arg8[%c0_11, %c0_12] : memref<18x128xf32, #tpu.memory_space<vmem>>, vector<16x128xf32>
    %c0_13 = arith.constant 0 : index
    %c0_14 = arith.constant 0 : index
    %c0_15 = arith.constant 0 : index
    %15 = vector.load %arg4[%c0_13, %c0_14, %c0_15] : memref<3x128x128xf32, #tpu.memory_space<vmem>>, vector<1x128x128xf32>
    %16 = vector.shape_cast %15 : vector<1x128x128xf32> to vector<128x128xf32>
    %cst_16 = arith.constant dense<0.000000e+00> : vector<16x128xf32>
    %17 = tpu.matmul %14, %16, %cst_16 {dimension_numbers = #tpu.dot_dimension_numbers<[1], [0], [0], [1], [0, 0, 1, 1], [], []>} : vector<16x128xf32>, vector<128x128xf32>, vector<16x128xf32> -> vector<16x128xf32>
    %c1_17 = arith.constant 1 : index
    %c0_18 = arith.constant 0 : index
    %18 = vector.load %arg8[%c1_17, %c0_18] : memref<18x128xf32, #tpu.memory_space<vmem>>, vector<16x128xf32>
    %c1_19 = arith.constant 1 : index
    %c0_20 = arith.constant 0 : index
    %c0_21 = arith.constant 0 : index
    %19 = vector.load %arg4[%c1_19, %c0_20, %c0_21] : memref<3x128x128xf32, #tpu.memory_space<vmem>>, vector<1x128x128xf32>
    %20 = vector.shape_cast %19 : vector<1x128x128xf32> to vector<128x128xf32>
    %cst_22 = arith.constant dense<0.000000e+00> : vector<16x128xf32>
    %21 = tpu.matmul %18, %20, %cst_22 {dimension_numbers = #tpu.dot_dimension_numbers<[1], [0], [0], [1], [0, 0, 1, 1], [], []>} : vector<16x128xf32>, vector<128x128xf32>, vector<16x128xf32> -> vector<16x128xf32>
    %22 = arith.addf %17, %21 : vector<16x128xf32>
    %c2 = arith.constant 2 : index
    %c0_23 = arith.constant 0 : index
    %23 = vector.load %arg8[%c2, %c0_23] : memref<18x128xf32, #tpu.memory_space<vmem>>, vector<16x128xf32>
    %c2_24 = arith.constant 2 : index
    %c0_25 = arith.constant 0 : index
    %c0_26 = arith.constant 0 : index
    %24 = vector.load %arg4[%c2_24, %c0_25, %c0_26] : memref<3x128x128xf32, #tpu.memory_space<vmem>>, vector<1x128x128xf32>
    %25 = vector.shape_cast %24 : vector<1x128x128xf32> to vector<128x128xf32>
    %cst_27 = arith.constant dense<0.000000e+00> : vector<16x128xf32>
    %26 = tpu.matmul %23, %25, %cst_27 {dimension_numbers = #tpu.dot_dimension_numbers<[1], [0], [0], [1], [0, 0, 1, 1], [], []>} : vector<16x128xf32>, vector<128x128xf32>, vector<16x128xf32> -> vector<16x128xf32>
    %27 = arith.addf %22, %26 : vector<16x128xf32>
    %c0_28 = arith.constant 0 : index
    %c0_29 = arith.constant 0 : index
    %c0_30 = arith.constant 0 : index
    %28 = vector.load %arg5[%c0_28, %c0_29, %c0_30] : memref<1x16x128xf32, #tpu.memory_space<vmem>>, vector<1x16x128xf32>
    %29 = vector.shape_cast %28 : vector<1x16x128xf32> to vector<16x128xf32>
    %30 = vector.shape_cast %27 : vector<16x128xf32> to vector<1x16x128xf32>
    tpu.vector_store %arg5[%c0_28, %c0_29, %c0_30], %30 {strides = array<i32>} : memref<1x16x128xf32, #tpu.memory_space<vmem>>, vector<1x16x128xf32>,
    %cst_31 = arith.constant dense<0.000000e+00> : vector<128xf32>
    %31 = vector.multi_reduction <add>, %27, %cst_31 [0] : vector<16x128xf32> to vector<128xf32>
    %32 = vector.shape_cast %31 : vector<128xf32> to vector<1x128xf32>
    %c0_32 = arith.constant 0 : index
    %c0_33 = arith.constant 0 : index
    %c0_34 = arith.constant 0 : index
    %33 = vector.load %arg6[%c0_32, %c0_33, %c0_34] : memref<1x1x128xf32, #tpu.memory_space<vmem>>, vector<1x1x128xf32>
    %34 = vector.shape_cast %33 : vector<1x1x128xf32> to vector<1x128xf32>
    %35 = vector.shape_cast %32 : vector<1x128xf32> to vector<1x1x128xf32>
    tpu.vector_store %arg6[%c0_32, %c0_33, %c0_34], %35 {strides = array<i32>} : memref<1x1x128xf32, #tpu.memory_space<vmem>>, vector<1x1x128xf32>,
    %36 = arith.mulf %27, %27 : vector<16x128xf32>
    %cst_35 = arith.constant dense<0.000000e+00> : vector<128xf32>
    %37 = vector.multi_reduction <add>, %36, %cst_35 [0] : vector<16x128xf32> to vector<128xf32>
    %38 = vector.shape_cast %37 : vector<128xf32> to vector<1x128xf32>
    %c0_36 = arith.constant 0 : index
    %c0_37 = arith.constant 0 : index
    %c0_38 = arith.constant 0 : index
    %39 = vector.load %arg7[%c0_36, %c0_37, %c0_38] : memref<1x1x128xf32, #tpu.memory_space<vmem>>, vector<1x1x128xf32>
    %40 = vector.shape_cast %39 : vector<1x1x128xf32> to vector<1x128xf32>
    %41 = vector.shape_cast %38 : vector<1x128xf32> to vector<1x1x128xf32>
    tpu.vector_store %arg7[%c0_36, %c0_37, %c0_38], %41 {strides = array<i32>} : memref<1x1x128xf32, #tpu.memory_space<vmem>>, vector<1x1x128xf32>,
    return
  }
  func.func @transform_0(%arg0: i32) -> (i32, i32, i32) {
    %c0_i32 = arith.constant 0 : i32
    %c0_i32_0 = arith.constant 0 : i32
    %c0_i32_1 = arith.constant 0 : i32
    return %arg0, %c0_i32, %c0_i32_0 : i32, i32, i32
  }
  func.func @transform_1(%arg0: i32) -> (i32, i32) {
    %c0_i32 = arith.constant 0 : i32
    %c0_i32_0 = arith.constant 0 : i32
    %c0_i32_1 = arith.constant 0 : i32
    return %c0_i32, %c0_i32_0 : i32, i32
  }
  func.func @transform_2(%arg0: i32) -> (i32, i32) {
    %c0_i32 = arith.constant 0 : i32
    %c0_i32_0 = arith.constant 0 : i32
    %c0_i32_1 = arith.constant 0 : i32
    return %c0_i32, %c0_i32_0 : i32, i32
  }
  func.func @transform_3(%arg0: i32) -> (i32, i32, i32) {
    %c0_i32 = arith.constant 0 : i32
    %c0_i32_0 = arith.constant 0 : i32
    %c0_i32_1 = arith.constant 0 : i32
    %c0_i32_2 = arith.constant 0 : i32
    return %c0_i32, %c0_i32_0, %c0_i32_1 : i32, i32, i32
  }
  func.func @transform_4(%arg0: i32) -> (i32, i32, i32) {
    %c0_i32 = arith.constant 0 : i32
    %c0_i32_0 = arith.constant 0 : i32
    %c0_i32_1 = arith.constant 0 : i32
    return %arg0, %c0_i32, %c0_i32_0 : i32, i32, i32
  }
  func.func @transform_5(%arg0: i32) -> (i32, i32, i32) {
    %c0_i32 = arith.constant 0 : i32
    %c0_i32_0 = arith.constant 0 : i32
    %c0_i32_1 = arith.constant 0 : i32
    return %arg0, %c0_i32, %c0_i32_0 : i32, i32, i32
  }
  func.func @transform_6(%arg0: i32) -> (i32, i32, i32) {
    %c0_i32 = arith.constant 0 : i32
    %c0_i32_0 = arith.constant 0 : i32
    %c0_i32_1 = arith.constant 0 : i32
    return %arg0, %c0_i32, %c0_i32_0 : i32, i32, i32
  }
}

module attributes {stable_mosaic.version = 11 : i64} {
  func.func @bn2_residual_kernel(%arg0: i32, %arg1: memref<1x16x128xf32, #tpu.memory_space<vmem>>, %arg2: memref<1x16x128xf32, #tpu.memory_space<vmem>>, %arg3: memref<1x128xf32, #tpu.memory_space<vmem>>, %arg4: memref<1x128xf32, #tpu.memory_space<vmem>>, %arg5: memref<1x16x128xf32, #tpu.memory_space<vmem>>) attributes {dimension_semantics = [#tpu.dimension_semantics<parallel>], iteration_bounds = array<i64: 2>, scalar_prefetch = 0 : i64, scratch_operands = 0 : i64, tpu.core_type = #tpu.core_type<tc>, window_params = [{transform_indices = @transform_0, window_bounds = array<i64: 1, 16, 128>}, {transform_indices = @transform_1, window_bounds = array<i64: 1, 16, 128>}, {pipeline_mode = #tpu.pipeline_mode<synchronous>, transform_indices = @transform_2, window_bounds = array<i64: 1, 128>}, {pipeline_mode = #tpu.pipeline_mode<synchronous>, transform_indices = @transform_3, window_bounds = array<i64: 1, 128>}, {transform_indices = @transform_4, window_bounds = array<i64: 1, 16, 128>}]} {
    %c0 = arith.constant 0 : index
    %c0_0 = arith.constant 0 : index
    %c0_1 = arith.constant 0 : index
    %0 = vector.load %arg1[%c0, %c0_0, %c0_1] : memref<1x16x128xf32, #tpu.memory_space<vmem>>, vector<1x16x128xf32>
    %1 = vector.shape_cast %0 : vector<1x16x128xf32> to vector<16x128xf32>
    %c0_2 = arith.constant 0 : index
    %c0_3 = arith.constant 0 : index
    %2 = vector.load %arg3[%c0_2, %c0_3] : memref<1x128xf32, #tpu.memory_space<vmem>>, vector<1x128xf32>
    %3 = vector.broadcast %2 : vector<1x128xf32> to vector<16x128xf32>
    %4 = arith.mulf %1, %3 : vector<16x128xf32>
    %c0_4 = arith.constant 0 : index
    %c0_5 = arith.constant 0 : index
    %5 = vector.load %arg4[%c0_4, %c0_5] : memref<1x128xf32, #tpu.memory_space<vmem>>, vector<1x128xf32>
    %6 = vector.broadcast %5 : vector<1x128xf32> to vector<16x128xf32>
    %7 = arith.addf %4, %6 : vector<16x128xf32>
    %c0_6 = arith.constant 0 : index
    %c0_7 = arith.constant 0 : index
    %c0_8 = arith.constant 0 : index
    %8 = vector.load %arg2[%c0_6, %c0_7, %c0_8] : memref<1x16x128xf32, #tpu.memory_space<vmem>>, vector<1x16x128xf32>
    %9 = vector.shape_cast %8 : vector<1x16x128xf32> to vector<16x128xf32>
    %10 = arith.addf %7, %9 : vector<16x128xf32>
    %cst = arith.constant 0.000000e+00 : f32
    %11 = vector.broadcast %cst : f32 to vector<16x128xf32>
    %12 = arith.maximumf %10, %11 : vector<16x128xf32>
    %c0_9 = arith.constant 0 : index
    %c0_10 = arith.constant 0 : index
    %c0_11 = arith.constant 0 : index
    %13 = vector.load %arg5[%c0_9, %c0_10, %c0_11] : memref<1x16x128xf32, #tpu.memory_space<vmem>>, vector<1x16x128xf32>
    %14 = vector.shape_cast %13 : vector<1x16x128xf32> to vector<16x128xf32>
    %15 = vector.shape_cast %12 : vector<16x128xf32> to vector<1x16x128xf32>
    tpu.vector_store %arg5[%c0_9, %c0_10, %c0_11], %15 {strides = array<i32>} : memref<1x16x128xf32, #tpu.memory_space<vmem>>, vector<1x16x128xf32>,
    return
  }
  func.func @transform_0(%arg0: i32) -> (i32, i32, i32) {
    %c0_i32 = arith.constant 0 : i32
    %c0_i32_0 = arith.constant 0 : i32
    %c0_i32_1 = arith.constant 0 : i32
    return %arg0, %c0_i32, %c0_i32_0 : i32, i32, i32
  }
  func.func @transform_1(%arg0: i32) -> (i32, i32, i32) {
    %c0_i32 = arith.constant 0 : i32
    %c0_i32_0 = arith.constant 0 : i32
    %c0_i32_1 = arith.constant 0 : i32
    return %arg0, %c0_i32, %c0_i32_0 : i32, i32, i32
  }
  func.func @transform_2(%arg0: i32) -> (i32, i32) {
    %c0_i32 = arith.constant 0 : i32
    %c0_i32_0 = arith.constant 0 : i32
    %c0_i32_1 = arith.constant 0 : i32
    return %c0_i32, %c0_i32_0 : i32, i32
  }
  func.func @transform_3(%arg0: i32) -> (i32, i32) {
    %c0_i32 = arith.constant 0 : i32
    %c0_i32_0 = arith.constant 0 : i32
    %c0_i32_1 = arith.constant 0 : i32
    return %c0_i32, %c0_i32_0 : i32, i32
  }
  func.func @transform_4(%arg0: i32) -> (i32, i32, i32) {
    %c0_i32 = arith.constant 0 : i32
    %c0_i32_0 = arith.constant 0 : i32
    %c0_i32_1 = arith.constant 0 : i32
    return %arg0, %c0_i32, %c0_i32_0 : i32, i32, i32
  }
}

</mosaic_0001>

<llo_original>
// kernel: basic_block_forward.3
$region0: #{basic_block_forward.3}
  #allocation0 [shape = 'u32[]', space=smem, size = 0x4, offset = 0x4, fixed_abs, tag = 'smem constant byte address 0x4 - core index']
  #allocation1 [shape = 'u32[144,128]{1,0:T(1,128)}', space=vmem, size = 0x12000, scoped, tag = 'internal scratch']
  #allocation2 [shape = 'f32[18,128]{1,0:T(8,128)}', space=vmem, size = 0x3000, scoped, tag = 'scratch operand']
  %s0 = inlined_call_operand.vmem [shape: f32[2,16,128], index: 0, kind: input, shape index: {}]
  %s1 = inlined_call_operand.vmem [shape: f32[3,128,128], index: 1, kind: input, shape index: {}]
  %s2 = inlined_call_operand.vmem [shape: f32[2,16,128], index: 2, kind: output, shape index: {0}]
  %s3 = inlined_call_operand.vmem [shape: f32[2,1,128], index: 3, kind: output, shape index: {1}]
  %s4 = inlined_call_operand.vmem [shape: f32[2,1,128], index: 4, kind: output, shape index: {2}]
  %5 = xla_tuple %s2, %s3, %s4
  %s6 = sld [smem:[#allocation0]]
  $region57: #{basic_block_forward.3} parent=0
    _
  %s8 = ssub.s32 1, %s6
  %s9 = scalar_select 0, %s8, %s6
  loop: start=0, step=1, limit=4
  $region2: #{basic_block_forward.3} parent=0 // loop_pre_header
    _
  $region3: #{basic_block_forward.3} parent=0 // loop_header
    %s11 = sphi 0, %s15
    %p12 = scmp.ge.s32.totalorder %s11, 4
    %s21 = sphi 0, %s23
    %s24 = sphi 0, %s21
    %s25 = sphi 0, %s24
    %s41 = sphi 0, %s25
    %s45 = sphi 0, %s45
    %s47 = sphi 0, %s45
    %s48 = sphi 0, %s47
    %s62 = sphi 0, %s48
    %s68 = sphi 0, %s70
    %s71 = sphi 0, %s68
    %s72 = sphi 0, %s71
    %s88 = sphi 0, %s72
    %s94 = sphi 0, %s96
    %s97 = sphi 0, %s94
    %s98 = sphi 0, %s97
    %s114 = sphi 0, %s98
    %s120 = sphi 0, %s122
    %s123 = sphi 0, %s120
    %s124 = sphi 0, %s123
    %s140 = sphi 0, %s124
  $region4: #{basic_block_forward.3} parent=0 // loop_header_branch
    %14 = sbr.rel (%p12) target = $region8
  $region5: #{basic_block_forward.3} parent=0 // loop_body
    %s16 = ssub.s32 %s11, 1
    %s17 = ssub.s32 %s11, 2
    %s18 = sadd.s32 %s11, 1
    %s19 = ssub.s32 %s11, %s18
    %p20 = scmp.eq.s32.totalorder %s19, 0
    %s22 = sadd.s32 %s21, 1
    %s23 = scalar_select %p20, %s21, %s22
    %p26 = pneg %p20
    %p27 = scmp.eq.s32.totalorder %s11, 1
    %p28 = por %p26, %p27
    %p29 = scmp.ne.s32.totalorder %s21, %s24
    %p30 = scmp.eq.s32.totalorder %s11, 0
    %p31 = por %p29, %p30
    %p32 = scmp.ne.s32.totalorder %s21, %s24
    %p33 = scmp.eq.s32.totalorder %s16, 1
    %p34 = por %p32, %p33
    %p35 = scmp.ne.s32.totalorder %s24, %s25
    %p36 = scmp.eq.s32.totalorder %s16, 0
    %p37 = por %p35, %p36
    %p38 = scmp.ne.s32.totalorder %s24, %s25
    %p39 = scmp.eq.s32.totalorder %s17, 1
    %p40 = por %p38, %p39
    %p42 = scmp.ne.s32.totalorder %s25, %s41
    %p43 = scmp.eq.s32.totalorder %s17, 0
    %p44 = por %p42, %p43
    %s46 = sadd.s32 %s45, 1
    %p49 = scmp.eq.s32.totalorder %s11, 1
    %p50 = scmp.ne.s32.totalorder %s45, %s47
    %p51 = scmp.eq.s32.totalorder %s11, 0
    %p52 = por %p50, %p51
    %p53 = scmp.ne.s32.totalorder %s45, %s47
    %p54 = scmp.eq.s32.totalorder %s16, 1
    %p55 = por %p53, %p54
    %p56 = scmp.ne.s32.totalorder %s47, %s48
    %p57 = scmp.eq.s32.totalorder %s16, 0
    %p58 = por %p56, %p57
    %p59 = scmp.ne.s32.totalorder %s47, %s48
    %p60 = scmp.eq.s32.totalorder %s17, 1
    %p61 = por %p59, %p60
    %p63 = scmp.ne.s32.totalorder %s48, %s62
    %p64 = scmp.eq.s32.totalorder %s17, 0
    %p65 = por %p63, %p64
    %s66 = ssub.s32 %s11, %s18
    %p67 = scmp.eq.s32.totalorder %s66, 0
    %s69 = sadd.s32 %s68, 1
    %s70 = scalar_select %p67, %s68, %s69
    %p73 = pneg %p67
    %p74 = scmp.eq.s32.totalorder %s11, 1
    %p75 = por %p73, %p74
    %p76 = scmp.ne.s32.totalorder %s68, %s71
    %p77 = scmp.eq.s32.totalorder %s11, 0
    %p78 = por %p76, %p77
    %p79 = scmp.ne.s32.totalorder %s68, %s71
    %p80 = scmp.eq.s32.totalorder %s16, 1
    %p81 = por %p79, %p80
    %p82 = scmp.ne.s32.totalorder %s71, %s72
    %p83 = scmp.eq.s32.totalorder %s16, 0
    %p84 = por %p82, %p83
    %p85 = scmp.ne.s32.totalorder %s71, %s72
    %p86 = scmp.eq.s32.totalorder %s17, 1
    %p87 = por %p85, %p86
    %p89 = scmp.ne.s32.totalorder %s72, %s88
    %p90 = scmp.eq.s32.totalorder %s17, 0
    %p91 = por %p89, %p90
    %s92 = ssub.s32 %s11, %s18
    %p93 = scmp.eq.s32.totalorder %s92, 0
    %s95 = sadd.s32 %s94, 1
    %s96 = scalar_select %p93, %s94, %s95
    %p99 = pneg %p93
    %p100 = scmp.eq.s32.totalorder %s11, 1
    %p101 = por %p99, %p100
    %p102 = scmp.ne.s32.totalorder %s94, %s97
    %p103 = scmp.eq.s32.totalorder %s11, 0
    %p104 = por %p102, %p103
    %p105 = scmp.ne.s32.totalorder %s94, %s97
    %p106 = scmp.eq.s32.totalorder %s16, 1
    %p107 = por %p105, %p106
    %p108 = scmp.ne.s32.totalorder %s97, %s98
    %p109 = scmp.eq.s32.totalorder %s16, 0
    %p110 = por %p108, %p109
    %p111 = scmp.ne.s32.totalorder %s97, %s98
    %p112 = scmp.eq.s32.totalorder %s17, 1
    %p113 = por %p111, %p112
    %p115 = scmp.ne.s32.totalorder %s98, %s114
    %p116 = scmp.eq.s32.totalorder %s17, 0
    %p117 = por %p115, %p116
    %s118 = ssub.s32 %s11, %s18
    %p119 = scmp.eq.s32.totalorder %s118, 0
    %s121 = sadd.s32 %s120, 1
    %s122 = scalar_select %p119, %s120, %s121
    %p125 = pneg %p119
    %p126 = scmp.eq.s32.totalorder %s11, 1
    %p127 = por %p125, %p126
    %p128 = scmp.ne.s32.totalorder %s120, %s123
    %p129 = scmp.eq.s32.totalorder %s11, 0
    %p130 = por %p128, %p129
    %p131 = scmp.ne.s32.totalorder %s120, %s123
    %p132 = scmp.eq.s32.totalorder %s16, 1
    %p133 = por %p131, %p132
    %p134 = scmp.ne.s32.totalorder %s123, %s124
    %p135 = scmp.eq.s32.totalorder %s16, 0
    %p136 = por %p134, %p135
    %p137 = scmp.ne.s32.totalorder %s123, %s124
    %p138 = scmp.eq.s32.totalorder %s17, 1
    %p139 = por %p137, %p138
    %p141 = scmp.ne.s32.totalorder %s124, %s140
    %p142 = scmp.eq.s32.totalorder %s17, 0
    %p143 = por %p141, %p142
    %p144 = scmp.le.s32.totalorder 1, %s11
    %p145 = scmp.lt.s32.totalorder %s11, 3
    %p146 = pnand %p144, %p145
    %p147 = pneg %p146
    // Predicated region
    $region9: #{basic_block_forward.3} parent=5 // pred_check
      _
    $region10: #{basic_block_forward.3} parent=5 // pred_check_branch
      %149 = sbr.rel (%p146) target = $region12
    $region11: #{basic_block_forward.3} parent=5 // pred_region
      %s150 = ssub.s32 %s11, 1
      // Predicated region
      $region13: #{basic_block_forward.3} parent=11 // pred_check
        %p151 = pneg %p58
      $region14: #{basic_block_forward.3} parent=11 // pred_check_branch
        %153 = sbr.rel (%p151) target = $region16
      $region15: #{basic_block_forward.3} parent=11 // pred_region
        _
      $region16: #{basic_block_forward.3} parent=11 // pred_fallthru
        _
    $region12: #{basic_block_forward.3} parent=5 // pred_fallthru
      _
    %p154 = scmp.lt.s32.totalorder %s11, 2
    // Predicated region
    $region17: #{basic_block_forward.3} parent=5 // pred_check
      %p155 = pneg %p154
    $region18: #{basic_block_forward.3} parent=5 // pred_check_branch
      %157 = sbr.rel (%p155) target = $region20
    $region19: #{basic_block_forward.3} parent=5 // pred_region
      // Predicated region
      $region21: #{basic_block_forward.3} parent=19 // pred_check
        %p158 = pneg %p31
      $region22: #{basic_block_forward.3} parent=19 // pred_check_branch
        %160 = sbr.rel (%p158) target = $region24
      $region23: #{basic_block_forward.3} parent=19 // pred_region
        %p161 = scmp.lt.s32.totalorder %s11, 1
        %s162 = scalar_select %p161, %s11, 1
        %s163 = smul.addr %s162, 2
        %s164 = smul.addr %s163, 8
        %s165 = scalar_lea.vmem %s0, %s164
      $region24: #{basic_block_forward.3} parent=19 // pred_fallthru
        _
    $region20: #{basic_block_forward.3} parent=5 // pred_fallthru
      _
    %p166 = scmp.le.s32.totalorder 1, %s11
    %p167 = scmp.lt.s32.totalorder %s11, 3
    %p168 = pnand %p166, %p167
    %p169 = pneg %p168
    // Predicated region
    $region25: #{basic_block_forward.3} parent=5 // pred_check
      _
    $region26: #{basic_block_forward.3} parent=5 // pred_check_branch
      %171 = sbr.rel (%p168) target = $region28
    $region27: #{basic_block_forward.3} parent=5 // pred_region
      %s172 = ssub.s32 %s11, 1
      %p173 = scmp.lt.s32.totalorder %s16, 1
      %s174 = scalar_select %p173, %s16, 1
      %s175 = smul.addr %s174, 2
      %s176 = smul.addr %s175, 8
      %s177 = scalar_lea.vmem %s0, %s176
      %p178 = pneg %p37
      %p179 = pneg %p34
      %p180 = pneg %p58
      %p181 = pneg %p55
      %p182 = pneg %p84
      %p183 = pneg %p81
      %p184 = scmp.lt.s32.totalorder %s16, 1
      %s185 = scalar_select %p184, %s16, 1
      %s186 = smul.addr %s185, 2
      %s187 = smul.addr %s186, 8
      %s188 = scalar_lea.vmem %s2, %s187
      %p189 = pneg %p110
      %p190 = pneg %p107
      %p191 = scmp.lt.s32.totalorder %s16, 1
      %s192 = scalar_select %p191, %s16, 1
      %s193 = scalar_lea.vmem %s3, %s192
      %p194 = pneg %p136
      %p195 = pneg %p133
      %p196 = scmp.lt.s32.totalorder %s16, 1
      %s197 = scalar_select %p196, %s16, 1
      %s198 = scalar_lea.vmem %s4, %s197
      %p199 = scmp.lt.s32.totalorder %s16, 1
      %s200 = scalar_select %p199, %s16, 1
      %s201 = smul.addr %s200, 2
      %s202 = smul.addr %s201, 8
      %s203 = scalar_lea.vmem %s0, %s202
      %p204 = scmp.lt.s32.totalorder %s16, 1
      %s205 = scalar_select %p204, %s16, 1
      %s206 = smul.addr %s205, 2
      %s207 = smul.addr %s206, 8
      %s208 = scalar_lea.vmem %s2, %s207
      %p209 = scmp.lt.s32.totalorder %s16, 1
      %s210 = scalar_select %p209, %s16, 1
      %s211 = scalar_lea.vmem %s3, %s210
      %p212 = scmp.lt.s32.totalorder %s16, 1
      %s213 = scalar_select %p212, %s16, 1
      %s214 = scalar_lea.vmem %s4, %s213
      %v215 = vld [vmem:[%s203] sm:$0xff]
      %v216 = vld [vmem:[%s203 + $0x8] sm:$0xff]
      %217 = vst [vmem:[#allocation2] sm:$0x1] 0.0
      %218 = vst [vmem:[#allocation2 + $0x11] sm:$0x1] 0.0
      %219 = vst [vmem:[#allocation2 + $0x1] sm:$0xff] %v215
      %220 = vst [vmem:[#allocation2 + $0x9] sm:$0xff] %v216
      %v221 = vld [vmem:[#allocation2] sm:$0xff]
      %v222 = vld [vmem:[#allocation2 + $0x8] sm:$0xff]
      %v223 = vld [vmem:[%s1] sm:$0xff]
      %v224 = vld [vmem:[%s1 + $0x8] sm:$0xff]
      %v225 = vld [vmem:[%s1 + $0x10] sm:$0xff]
      %v226 = vld [vmem:[%s1 + $0x18] sm:$0xff]
      %v227 = vld [vmem:[%s1 + $0x20] sm:$0xff]
      %v228 = vld [vmem:[%s1 + $0x28] sm:$0xff]
      %v229 = vld [vmem:[%s1 + $0x30] sm:$0xff]
      %v230 = vld [vmem:[%s1 + $0x38] sm:$0xff]
      %v231 = vld [vmem:[%s1 + $0x40] sm:$0xff]
      %v232 = vld [vmem:[%s1 + $0x48] sm:$0xff]
      %v233 = vld [vmem:[%s1 + $0x50] sm:$0xff]
      %v234 = vld [vmem:[%s1 + $0x58] sm:$0xff]
      %v235 = vld [vmem:[%s1 + $0x60] sm:$0xff]
      %v236 = vld [vmem:[%s1 + $0x68] sm:$0xff]
      %v237 = vld [vmem:[%s1 + $0x70] sm:$0xff]
      %v238 = vld [vmem:[%s1 + $0x78] sm:$0xff]
      %v239 = vld [vmem:[#allocation2 + $0x1] sm:$0xff]
      %v240 = vld [vmem:[#allocation2 + $0x9] sm:$0xff]
      %s241 = scalar_lea.vmem %s1, 128
      %v242 = vld [vmem:[%s241] sm:$0xff]
      %v243 = vld [vmem:[%s241 + $0x8] sm:$0xff]
      %v244 = vld [vmem:[%s241 + $0x10] sm:$0xff]
      %v245 = vld [vmem:[%s241 + $0x18] sm:$0xff]
      %v246 = vld [vmem:[%s241 + $0x20] sm:$0xff]
      %v247 = vld [vmem:[%s241 + $0x28] sm:$0xff]
      %v248 = vld [vmem:[%s241 + $0x30] sm:$0xff]
      %v249 = vld [vmem:[%s241 + $0x38] sm:$0xff]
      %v250 = vld [vmem:[%s241 + $0x40] sm:$0xff]
      %v251 = vld [vmem:[%s241 + $0x48] sm:$0xff]
      %v252 = vld [vmem:[%s241 + $0x50] sm:$0xff]
      %v253 = vld [vmem:[%s241 + $0x58] sm:$0xff]
      %v254 = vld [vmem:[%s241 + $0x60] sm:$0xff]
      %v255 = vld [vmem:[%s241 + $0x68] sm:$0xff]
      %v256 = vld [vmem:[%s241 + $0x70] sm:$0xff]
      %v257 = vld [vmem:[%s241 + $0x78] sm:$0xff]
      %258 = vmatprep.subr.mxu0 0.0
      %259 = vmatpush1.msra.mxu0 %v257
      %260 = vmatprep.subr.mxu0 0.0
      %261 = vmatpush1.msra.mxu0 %v256
      %262 = vmatprep.subr.mxu0 0.0
      %263 = vmatpush1.msra.mxu0 %v255
      %264 = vmatprep.subr.mxu0 0.0
      %265 = vmatpush1.msra.mxu0 %v254
      %266 = vmatprep.subr.mxu0 0.0
      %267 = vmatpush1.msra.mxu0 %v253
      %268 = vmatprep.subr.mxu0 0.0
      %269 = vmatpush1.msra.mxu0 %v252
      %270 = vmatprep.subr.mxu0 0.0
      %271 = vmatpush1.msra.mxu0 %v251
      %272 = vmatprep.subr.mxu0 0.0
      %273 = vmatpush1.msra.mxu0 %v250
      %274 = vmatprep.subr.mxu0 0.0
      %275 = vmatpush1.msra.mxu0 %v249
      %276 = vmatprep.subr.mxu0 0.0
      %277 = vmatpush1.msra.mxu0 %v248
      %278 = vmatprep.subr.mxu0 0.0
      %279 = vmatpush1.msra.mxu0 %v247
      %280 = vmatprep.subr.mxu0 0.0
      %281 = vmatpush1.msra.mxu0 %v246
      %282 = vmatprep.subr.mxu0 0.0
      %283 = vmatpush1.msra.mxu0 %v245
      %284 = vmatprep.subr.mxu0 0.0
      %285 = vmatpush1.msra.mxu0 %v244
      %286 = vmatprep.subr.mxu0 0.0
      %287 = vmatpush1.msra.mxu0 %v243
      %288 = vmatprep.subr.mxu0 0.0
      %289 = vmatpush1.msra.mxu0 %v242
      %290 = vmatprep.subr.mxu0 0.0
      %291 = vmatpush2.msra.mxu0 0.0
      %292 = vmatprep.subr.mxu0 0.0
      %293 = vmatpush2.msra.mxu0 0.0
      %294 = vmatprep.subr.mxu0 0.0
      %295 = vmatpush2.msra.mxu0 0.0
      %296 = vmatprep.subr.mxu0 0.0
      %297 = vmatpush2.msra.mxu0 0.0
      %298 = vmatprep.subr.mxu0 0.0
      %299 = vmatpush2.msra.mxu0 0.0
      %300 = vmatprep.subr.mxu0 0.0
      %301 = vmatpush2.msra.mxu0 0.0
      %302 = vmatprep.subr.mxu0 0.0
      %303 = vmatpush2.msra.mxu0 0.0
      %304 = vmatprep.subr.mxu0 0.0
      %305 = vmatpush2.msra.mxu0 0.0
      %306 = vmatprep.subr.mxu0 0.0
      %307 = vmatpush2.msra.mxu0 0.0
      %308 = vmatprep.subr.mxu0 0.0
      %309 = vmatpush2.msra.mxu0 0.0
      %310 = vmatprep.subr.mxu0 0.0
      %311 = vmatpush2.msra.mxu0 0.0
      %312 = vmatprep.subr.mxu0 0.0
      %313 = vmatpush2.msra.mxu0 0.0
      %314 = vmatprep.subr.mxu0 0.0
      %315 = vmatpush2.msra.mxu0 0.0
      %316 = vmatprep.subr.mxu0 0.0
      %317 = vmatpush2.msra.mxu0 0.0
      %318 = vmatprep.subr.mxu0 0.0
      %319 = vmatpush2.msra.mxu0 0.0
      %320 = vmatprep.subr.mxu0 0.0
      %321 = vmatpush2.msra.mxu0 0.0
      %322 = vmatprep.mubr.f32.mxu0 0.0
      %323 = vmatmul.mubr.f32.gmra.mxu0 %v239
      %v324 = vpop.f32.mrf.mxu0
      %v325 = vadd.f32 0.0, %v324
      %v326 = vpop.f32.mrf.mxu0
      %327 = vmatprep.mubr.f32.mxu0 0.0
      %328 = vmatmul.mubr.f32.gmra.mxu0 %v240
      %v329 = vpop.f32.mrf.mxu0
      %v330 = vadd.f32 0.0, %v329
      %v331 = vpop.f32.mrf.mxu0
      %332 = vdwg.mxu0
      %333 = vmatprep.subr.mxu0 0.0
      %334 = vmatpush1.msra.mxu0 %v238
      %335 = vmatprep.subr.mxu0 0.0
      %336 = vmatpush1.msra.mxu0 %v237
      %337 = vmatprep.subr.mxu0 0.0
      %338 = vmatpush1.msra.mxu0 %v236
      %339 = vmatprep.subr.mxu0 0.0
      %340 = vmatpush1.msra.mxu0 %v235
      %341 = vmatprep.subr.mxu0 0.0
      %342 = vmatpush1.msra.mxu0 %v234
      %343 = vmatprep.subr.mxu0 0.0
      %344 = vmatpush1.msra.mxu0 %v233
      %345 = vmatprep.subr.mxu0 0.0
      %346 = vmatpush1.msra.mxu0 %v232
      %347 = vmatprep.subr.mxu0 0.0
      %348 = vmatpush1.msra.mxu0 %v231
      %349 = vmatprep.subr.mxu0 0.0
      %350 = vmatpush1.msra.mxu0 %v230
      %351 = vmatprep.subr.mxu0 0.0
      %352 = vmatpush1.msra.mxu0 %v229
      %353 = vmatprep.subr.mxu0 0.0
      %354 = vmatpush1.msra.mxu0 %v228
      %355 = vmatprep.subr.mxu0 0.0
      %356 = vmatpush1.msra.mxu0 %v227
      %357 = vmatprep.subr.mxu0 0.0
      %358 = vmatpush1.msra.mxu0 %v226
      %359 = vmatprep.subr.mxu0 0.0
      %360 = vmatpush1.msra.mxu0 %v225
      %361 = vmatprep.subr.mxu0 0.0
      %362 = vmatpush1.msra.mxu0 %v224
      %363 = vmatprep.subr.mxu0 0.0
      %364 = vmatpush1.msra.mxu0 %v223
      %365 = vmatprep.subr.mxu0 0.0
      %366 = vmatpush2.msra.mxu0 0.0
      %367 = vmatprep.subr.mxu0 0.0
      %368 = vmatpush2.msra.mxu0 0.0
      %369 = vmatprep.subr.mxu0 0.0
      %370 = vmatpush2.msra.mxu0 0.0
      %371 = vmatprep.subr.mxu0 0.0
      %372 = vmatpush2.msra.mxu0 0.0
      %373 = vmatprep.subr.mxu0 0.0
      %374 = vmatpush2.msra.mxu0 0.0
      %375 = vmatprep.subr.mxu0 0.0
      %376 = vmatpush2.msra.mxu0 0.0
      %377 = vmatprep.subr.mxu0 0.0
      %378 = vmatpush2.msra.mxu0 0.0
      %379 = vmatprep.subr.mxu0 0.0
      %380 = vmatpush2.msra.mxu0 0.0
      %381 = vmatprep.subr.mxu0 0.0
      %382 = vmatpush2.msra.mxu0 0.0
      %383 = vmatprep.subr.mxu0 0.0
      %384 = vmatpush2.msra.mxu0 0.0
      %385 = vmatprep.subr.mxu0 0.0
      %386 = vmatpush2.msra.mxu0 0.0
      %387 = vmatprep.subr.mxu0 0.0
      %388 = vmatpush2.msra.mxu0 0.0
      %389 = vmatprep.subr.mxu0 0.0
      %390 = vmatpush2.msra.mxu0 0.0
      %391 = vmatprep.subr.mxu0 0.0
      %392 = vmatpush2.msra.mxu0 0.0
      %393 = vmatprep.subr.mxu0 0.0
      %394 = vmatpush2.msra.mxu0 0.0
      %395 = vmatprep.subr.mxu0 0.0
      %396 = vmatpush2.msra.mxu0 0.0
      %397 = vmatprep.mubr.f32.mxu0 0.0
      %398 = vmatmul.mubr.f32.gmra.mxu0 %v221
      %v399 = vpop.f32.mrf.mxu0
      %v400 = vadd.f32 %v325, %v399
      %v401 = vpop.f32.mrf.mxu0
      %402 = vmatprep.mubr.f32.mxu0 0.0
      %403 = vmatmul.mubr.f32.gmra.mxu0 %v222
      %v404 = vpop.f32.mrf.mxu0
      %v405 = vadd.f32 %v330, %v404
      %v406 = vpop.f32.mrf.mxu0
      %407 = vdwg.mxu0
      %v408 = vld [vmem:[#allocation2 + $0x2] sm:$0xff]
      %v409 = vld [vmem:[#allocation2 + $0xa] sm:$0xff]
      %s410 = scalar_lea.vmem %s1, 256
      %v411 = vld [vmem:[%s410] sm:$0xff]
      %v412 = vld [vmem:[%s410 + $0x8] sm:$0xff]
      %v413 = vld [vmem:[%s410 + $0x10] sm:$0xff]
      %v414 = vld [vmem:[%s410 + $0x18] sm:$0xff]
      %v415 = vld [vmem:[%s410 + $0x20] sm:$0xff]
      %v416 = vld [vmem:[%s410 + $0x28] sm:$0xff]
      %v417 = vld [vmem:[%s410 + $0x30] sm:$0xff]
      %v418 = vld [vmem:[%s410 + $0x38] sm:$0xff]
      %v419 = vld [vmem:[%s410 + $0x40] sm:$0xff]
      %v420 = vld [vmem:[%s410 + $0x48] sm:$0xff]
      %v421 = vld [vmem:[%s410 + $0x50] sm:$0xff]
      %v422 = vld [vmem:[%s410 + $0x58] sm:$0xff]
      %v423 = vld [vmem:[%s410 + $0x60] sm:$0xff]
      %v424 = vld [vmem:[%s410 + $0x68] sm:$0xff]
      %v425 = vld [vmem:[%s410 + $0x70] sm:$0xff]
      %v426 = vld [vmem:[%s410 + $0x78] sm:$0xff]
      %427 = vmatprep.subr.mxu0 0.0
      %428 = vmatpush1.msra.mxu0 %v426
      %429 = vmatprep.subr.mxu0 0.0
      %430 = vmatpush1.msra.mxu0 %v425
      %431 = vmatprep.subr.mxu0 0.0
      %432 = vmatpush1.msra.mxu0 %v424
      %433 = vmatprep.subr.mxu0 0.0
      %434 = vmatpush1.msra.mxu0 %v423
      %435 = vmatprep.subr.mxu0 0.0
      %436 = vmatpush1.msra.mxu0 %v422
      %437 = vmatprep.subr.mxu0 0.0
      %438 = vmatpush1.msra.mxu0 %v421
      %439 = vmatprep.subr.mxu0 0.0
      %440 = vmatpush1.msra.mxu0 %v420
      %441 = vmatprep.subr.mxu0 0.0
      %442 = vmatpush1.msra.mxu0 %v419
      %443 = vmatprep.subr.mxu0 0.0
      %444 = vmatpush1.msra.mxu0 %v418
      %445 = vmatprep.subr.mxu0 0.0
      %446 = vmatpush1.msra.mxu0 %v417
      %447 = vmatprep.subr.mxu0 0.0
      %448 = vmatpush1.msra.mxu0 %v416
      %449 = vmatprep.subr.mxu0 0.0
      %450 = vmatpush1.msra.mxu0 %v415
      %451 = vmatprep.subr.mxu0 0.0
      %452 = vmatpush1.msra.mxu0 %v414
      %453 = vmatprep.subr.mxu0 0.0
      %454 = vmatpush1.msra.mxu0 %v413
      %455 = vmatprep.subr.mxu0 0.0
      %456 = vmatpush1.msra.mxu0 %v412
      %457 = vmatprep.subr.mxu0 0.0
      %458 = vmatpush1.msra.mxu0 %v411
      %459 = vmatprep.subr.mxu0 0.0
      %460 = vmatpush2.msra.mxu0 0.0
      %461 = vmatprep.subr.mxu0 0.0
      %462 = vmatpush2.msra.mxu0 0.0
      %463 = vmatprep.subr.mxu0 0.0
      %464 = vmatpush2.msra.mxu0 0.0
      %465 = vmatprep.subr.mxu0 0.0
      %466 = vmatpush2.msra.mxu0 0.0
      %467 = vmatprep.subr.mxu0 0.0
      %468 = vmatpush2.msra.mxu0 0.0
      %469 = vmatprep.subr.mxu0 0.0
      %470 = vmatpush2.msra.mxu0 0.0
      %471 = vmatprep.subr.mxu0 0.0
      %472 = vmatpush2.msra.mxu0 0.0
      %473 = vmatprep.subr.mxu0 0.0
      %474 = vmatpush2.msra.mxu0 0.0
      %475 = vmatprep.subr.mxu0 0.0
      %476 = vmatpush2.msra.mxu0 0.0
      %477 = vmatprep.subr.mxu0 0.0
      %478 = vmatpush2.msra.mxu0 0.0
      %479 = vmatprep.subr.mxu0 0.0
      %480 = vmatpush2.msra.mxu0 0.0
      %481 = vmatprep.subr.mxu0 0.0
      %482 = vmatpush2.msra.mxu0 0.0
      %483 = vmatprep.subr.mxu0 0.0
      %484 = vmatpush2.msra.mxu0 0.0
      %485 = vmatprep.subr.mxu0 0.0
      %486 = vmatpush2.msra.mxu0 0.0
      %487 = vmatprep.subr.mxu0 0.0
      %488 = vmatpush2.msra.mxu0 0.0
      %489 = vmatprep.subr.mxu0 0.0
      %490 = vmatpush2.msra.mxu0 0.0
      %491 = vmatprep.mubr.f32.mxu0 0.0
      %492 = vmatmul.mubr.f32.gmra.mxu0 %v408
      %v493 = vpop.f32.mrf.mxu0
      %v494 = vadd.f32 0.0, %v493
      %v495 = vpop.f32.mrf.mxu0
      %496 = vmatprep.mubr.f32.mxu0 0.0
      %497 = vmatmul.mubr.f32.gmra.mxu0 %v409
      %v498 = vpop.f32.mrf.mxu0
      %v499 = vadd.f32 0.0, %v498
      %v500 = vpop.f32.mrf.mxu0
      %501 = vdwg.mxu0
      %v502 = vadd.f32 %v400, %v494
      %v503 = vadd.f32 %v405, %v499
      %504 = vst [vmem:[%s208] sm:$0xff] %v502
      %505 = vst [vmem:[%s208 + $0x8] sm:$0xff] %v503
      %v506 = vadd.f32 %v502, %v503
      %v507 = vrot.slane %v506, 4
      %v508 = vadd.f32 %v506, %v507
      %v509 = vrot.slane %v508, 2
      %v510 = vadd.f32 %v508, %v509
      %v511 = vrot.slane %v510, 1
      %v512 = vadd.f32 %v510, %v511
      %513 = vst [vmem:[%s211] sm:$0x1] %v512
      %v514 = vmul.f32 %v502, %v502
      %v515 = vmul.f32 %v503, %v503
      %v516 = vadd.f32 %v514, %v515
      %v517 = vrot.slane %v516, 4
      %v518 = vadd.f32 %v516, %v517
      %v519 = vrot.slane %v518, 2
      %v520 = vadd.f32 %v518, %v519
      %v521 = vrot.slane %v520, 1
      %v522 = vadd.f32 %v520, %v521
      %523 = vst [vmem:[%s214] sm:$0x1] %v522
      %p524 = scmp.lt.s32.totalorder %s16, 1
      %s525 = scalar_select %p524, %s16, 1
      %s526 = smul.addr %s525, 2
      %s527 = smul.addr %s526, 8
      %s528 = scalar_lea.vmem %s2, %s527
      %p529 = scmp.lt.s32.totalorder %s16, 1
      %s530 = scalar_select %p529, %s16, 1
      %s531 = scalar_lea.vmem %s3, %s530
      %p532 = scmp.lt.s32.totalorder %s16, 1
      %s533 = scalar_select %p532, %s16, 1
      %s534 = scalar_lea.vmem %s4, %s533
      // Predicated region
      $region29: #{basic_block_forward.3} parent=27 // pred_check
        %p535 = pneg %p81
      $region30: #{basic_block_forward.3} parent=27 // pred_check_branch
        %537 = sbr.rel (%p535) target = $region32
      $region31: #{basic_block_forward.3} parent=27 // pred_region
        _
      $region32: #{basic_block_forward.3} parent=27 // pred_fallthru
        _
      // Predicated region
      $region33: #{basic_block_forward.3} parent=27 // pred_check
        %p538 = pneg %p107
      $region34: #{basic_block_forward.3} parent=27 // pred_check_branch
        %540 = sbr.rel (%p538) target = $region36
      $region35: #{basic_block_forward.3} parent=27 // pred_region
        _
      $region36: #{basic_block_forward.3} parent=27 // pred_fallthru
        _
      // Predicated region
      $region37: #{basic_block_forward.3} parent=27 // pred_check
        %p541 = pneg %p133
      $region38: #{basic_block_forward.3} parent=27 // pred_check_branch
        %543 = sbr.rel (%p541) target = $region40
      $region39: #{basic_block_forward.3} parent=27 // pred_region
        _
      $region40: #{basic_block_forward.3} parent=27 // pred_fallthru
        _
    $region28: #{basic_block_forward.3} parent=5 // pred_fallthru
      _
    %p544 = scmp.le.s32.totalorder 2, %s11
    // Predicated region
    $region41: #{basic_block_forward.3} parent=5 // pred_check
      %p545 = pneg %p544
    $region42: #{basic_block_forward.3} parent=5 // pred_check_branch
      %547 = sbr.rel (%p545) target = $region44
    $region43: #{basic_block_forward.3} parent=5 // pred_region
      %s548 = ssub.s32 %s11, 2
      // Predicated region
      $region45: #{basic_block_forward.3} parent=43 // pred_check
        %p549 = pneg %p87
      $region46: #{basic_block_forward.3} parent=43 // pred_check_branch
        %551 = sbr.rel (%p549) target = $region48
      $region47: #{basic_block_forward.3} parent=43 // pred_region
        %p552 = scmp.lt.s32.totalorder %s17, 1
        %s553 = scalar_select %p552, %s17, 1
        %s554 = smul.addr %s553, 2
        %s555 = smul.addr %s554, 8
        %s556 = scalar_lea.vmem %s2, %s555
      $region48: #{basic_block_forward.3} parent=43 // pred_fallthru
        _
      // Predicated region
      $region49: #{basic_block_forward.3} parent=43 // pred_check
        %p557 = pneg %p113
      $region50: #{basic_block_forward.3} parent=43 // pred_check_branch
        %559 = sbr.rel (%p557) target = $region52
      $region51: #{basic_block_forward.3} parent=43 // pred_region
        %p560 = scmp.lt.s32.totalorder %s17, 1
        %s561 = scalar_select %p560, %s17, 1
        %s562 = scalar_lea.vmem %s3, %s561
      $region52: #{basic_block_forward.3} parent=43 // pred_fallthru
        _
      // Predicated region
      $region53: #{basic_block_forward.3} parent=43 // pred_check
        %p563 = pneg %p139
      $region54: #{basic_block_forward.3} parent=43 // pred_check_branch
        %565 = sbr.rel (%p563) target = $region56
      $region55: #{basic_block_forward.3} parent=43 // pred_region
        %p566 = scmp.lt.s32.totalorder %s17, 1
        %s567 = scalar_select %p566, %s17, 1
        %s568 = scalar_lea.vmem %s4, %s567
      $region56: #{basic_block_forward.3} parent=43 // pred_fallthru
        _
    $region44: #{basic_block_forward.3} parent=5 // pred_fallthru
      _
  $region6: #{basic_block_forward.3} parent=0 // loop_footer
    %s15 = sadd.s32 1, %s11
  $region7: #{basic_block_forward.3} parent=0 // loop_footer_branch
    %10 = sbr.rel target = $region3
  $region8: #{basic_block_forward.3} parent=0 // loop_exit
    _

// kernel: tile.23
$region0: #{tile.23}
  #allocation0 [shape = 's32[1]{0}', space=sflag, size = 0x4, scoped, tag = 'scoped memory for tile.23']
  %s0 = inlined_call_operand.vmem [shape: f32[8], index: 0, kind: input, shape index: {}]
  %s1 = inlined_call_operand.vmem [shape: f32[16,8], index: 1, kind: output, shape index: {}]
  // Predicated region
  $region2: #{tile.23} parent=0 // pred_check
    _
  $region3: #{tile.23} parent=0 // pred_check_branch
    %3 = sbr.rel (0) target = $region5
  $region4: #{tile.23} parent=0 // pred_region
    _
  $region5: #{tile.23} parent=0 // pred_fallthru
    _
  %v4 = vld [vmem:[%s0] ss:$0 sm:$0xff]
  %5 = vst [vmem:[%s1] sm:$0xff] %v4
  %s6 = scalar_lea.vmem %s1, 8
  %7 = vst [vmem:[%s6] sm:$0xff] %v4

// kernel: tile.24
$region0: #{tile.24}
  %s0 = inlined_call_operand.vmem [shape: f32[16,8], index: 0, kind: input, shape index: {}]
  %s1 = inlined_call_operand.vmem [shape: f32[1,128], index: 1, kind: output, shape index: {}]
  $region1: #{tile.24} parent=0
    #allocation0 [shape = 'u8[4096]{0}', space=vmem, size = 0x1000, scoped, tag = 'scoped mem for output reshape']
    %v2 = vld [vmem:[%s0] sm:$0x1]
    %vm3 = vcmask 64512
    %4 = vst.msk [vmem:[#allocation0] sm:$0x1] %vm3, %v2
    %s5 = scalar_lea.vmem %s0, 15
    %v6 = vld [vmem:[%s5] sm:$0x1]
    %7 = vrot.lane.b32.xlu0 %v6, 120
    %v8 = vpop.permute.xlu0 %7
    %vm9 = vcmask 1048512
    %10 = vst.msk [vmem:[#allocation0] sm:$0x1] %vm9, %v8
    %s11 = scalar_lea.vmem %s0, 14
    %v12 = vld [vmem:[%s11] sm:$0x1]
    %13 = vrot.lane.b32.xlu0 %v12, 112
    %v14 = vpop.permute.xlu0 %13
    %vm15 = vcmask 982912
    %16 = vst.msk [vmem:[#allocation0] sm:$0x1] %vm15, %v14
    %s17 = scalar_lea.vmem %s0, 13
    %v18 = vld [vmem:[%s17] sm:$0x1]
    %19 = vrot.lane.b32.xlu0 %v18, 104
    %v20 = vpop.permute.xlu0 %19
    %vm21 = vcmask 917312
    %22 = vst.msk [vmem:[#allocation0] sm:$0x1] %vm21, %v20
    %s23 = scalar_lea.vmem %s0, 12
    %v24 = vld [vmem:[%s23] sm:$0x1]
    %25 = vrot.lane.b32.xlu0 %v24, 96
    %v26 = vpop.permute.xlu0 %25
    %vm27 = vcmask 851712
    %28 = vst.msk [vmem:[#allocation0] sm:$0x1] %vm27, %v26
    %s29 = scalar_lea.vmem %s0, 11
    %v30 = vld [vmem:[%s29] sm:$0x1]
    %31 = vrot.lane.b32.xlu0 %v30, 88
    %v32 = vpop.permute.xlu0 %31
    %vm33 = vcmask 786112
    %34 = vst.msk [vmem:[#allocation0] sm:$0x1] %vm33, %v32
    %s35 = scalar_lea.vmem %s0, 10
    %v36 = vld [vmem:[%s35] sm:$0x1]
    %37 = vrot.lane.b32.xlu0 %v36, 80
    %v38 = vpop.permute.xlu0 %37
    %vm39 = vcmask 720512
    %40 = vst.msk [vmem:[#allocation0] sm:$0x1] %vm39, %v38
    %s41 = scalar_lea.vmem %s0, 9
    %v42 = vld [vmem:[%s41] sm:$0x1]
    %43 = vrot.lane.b32.xlu0 %v42, 72
    %v44 = vpop.permute.xlu0 %43
    %vm45 = vcmask 654912
    %46 = vst.msk [vmem:[#allocation0] sm:$0x1] %vm45, %v44
    %s47 = scalar_lea.vmem %s0, 8
    %v48 = vld [vmem:[%s47] sm:$0x1]
    %49 = vrot.lane.b32.xlu0 %v48, 64
    %v50 = vpop.permute.xlu0 %49
    %vm51 = vcmask 589312
    %52 = vst.msk [vmem:[#allocation0] sm:$0x1] %vm51, %v50
    %s53 = scalar_lea.vmem %s0, 7
    %v54 = vld [vmem:[%s53] sm:$0x1]
    %55 = vrot.lane.b32.xlu0 %v54, 56
    %v56 = vpop.permute.xlu0 %55
    %vm57 = vcmask 523712
    %58 = vst.msk [vmem:[#allocation0] sm:$0x1] %vm57, %v56
    %s59 = scalar_lea.vmem %s0, 6
    %v60 = vld [vmem:[%s59] sm:$0x1]
    %61 = vrot.lane.b32.xlu0 %v60, 48
    %v62 = vpop.permute.xlu0 %61
    %vm63 = vcmask 458112
    %64 = vst.msk [vmem:[#allocation0] sm:$0x1] %vm63, %v62
    %s65 = scalar_lea.vmem %s0, 5
    %v66 = vld [vmem:[%s65] sm:$0x1]
    %67 = vrot.lane.b32.xlu0 %v66, 40
    %v68 = vpop.permute.xlu0 %67
    %vm69 = vcmask 392512
    %70 = vst.msk [vmem:[#allocation0] sm:$0x1] %vm69, %v68
    %s71 = scalar_lea.vmem %s0, 4
    %v72 = vld [vmem:[%s71] sm:$0x1]
    %73 = vrot.lane.b32.xlu0 %v72, 32
    %v74 = vpop.permute.xlu0 %73
    %vm75 = vcmask 326912
    %76 = vst.msk [vmem:[#allocation0] sm:$0x1] %vm75, %v74
    %s77 = scalar_lea.vmem %s0, 3
    %v78 = vld [vmem:[%s77] sm:$0x1]
    %79 = vrot.lane.b32.xlu0 %v78, 24
    %v80 = vpop.permute.xlu0 %79
    %vm81 = vcmask 261312
    %82 = vst.msk [vmem:[#allocation0] sm:$0x1] %vm81, %v80
    %s83 = scalar_lea.vmem %s0, 2
    %v84 = vld [vmem:[%s83] sm:$0x1]
    %85 = vrot.lane.b32.xlu0 %v84, 16
    %v86 = vpop.permute.xlu0 %85
    %vm87 = vcmask 195712
    %88 = vst.msk [vmem:[#allocation0] sm:$0x1] %vm87, %v86
    %s89 = scalar_lea.vmem %s0, 1
    %v90 = vld [vmem:[%s89] sm:$0x1]
    %91 = vrot.lane.b32.xlu0 %v90, 8
    %v92 = vpop.permute.xlu0 %91
    %vm93 = vcmask 130112
    %94 = vst.msk [vmem:[#allocation0] sm:$0x1] %vm93, %v92
    %s96 = sshll.u32 1, 1
    %s97 = ssub.s32 %s96, 1
    %v99 = vld [vmem:[#allocation0] sm:%s97]
    %s100 = sshll.u32 1, 1
    %s101 = ssub.s32 %s100, 1
    %102 = vst [vmem:[%s1] sm:%s101] %v99

// kernel: basic_block_forward.5
$region0: #{basic_block_forward.5}
  #allocation0 [shape = 'u32[]', space=smem, size = 0x4, offset = 0x4, fixed_abs, tag = 'smem constant byte address 0x4 - core index']
  #allocation1 [shape = 'u32[144,128]{1,0:T(1,128)}', space=vmem, size = 0x12000, scoped, tag = 'internal scratch']
  %s0 = inlined_call_operand.vmem [shape: f32[2,16,128], index: 0, kind: input, shape index: {}]
  %s1 = inlined_call_operand.vmem [shape: f32[2,16,128], index: 1, kind: input, shape index: {}]
  %s2 = inlined_call_operand.vmem [shape: f32[1,128], index: 2, kind: input, shape index: {}]
  %s3 = inlined_call_operand.vmem [shape: f32[1,128], index: 3, kind: input, shape index: {}]
  %s4 = inlined_call_operand.vmem [shape: f32[2,16,128], index: 4, kind: output, shape index: {}]
  %s5 = sld [smem:[#allocation0]]
  $region49: #{basic_block_forward.5} parent=0
    _
  %s7 = ssub.s32 1, %s5
  %s8 = scalar_select 0, %s7, %s5
  loop: start=0, step=1, limit=4
  $region2: #{basic_block_forward.5} parent=0 // loop_pre_header
    _
  $region3: #{basic_block_forward.5} parent=0 // loop_header
    %s10 = sphi 0, %s14
    %p11 = scmp.ge.s32.totalorder %s10, 4
    %s20 = sphi 0, %s22
    %s23 = sphi 0, %s20
    %s24 = sphi 0, %s23
    %s40 = sphi 0, %s24
    %s46 = sphi 0, %s48
    %s49 = sphi 0, %s46
    %s50 = sphi 0, %s49
    %s66 = sphi 0, %s50
    %s70 = sphi 0, %s70
    %s72 = sphi 0, %s70
    %s73 = sphi 0, %s72
    %s87 = sphi 0, %s73
    %s91 = sphi 0, %s91
    %s93 = sphi 0, %s91
    %s94 = sphi 0, %s93
    %s108 = sphi 0, %s94
    %s114 = sphi 0, %s116
    %s117 = sphi 0, %s114
    %s118 = sphi 0, %s117
    %s134 = sphi 0, %s118
  $region4: #{basic_block_forward.5} parent=0 // loop_header_branch
    %13 = sbr.rel (%p11) target = $region8
  $region5: #{basic_block_forward.5} parent=0 // loop_body
    %s15 = ssub.s32 %s10, 1
    %s16 = ssub.s32 %s10, 2
    %s17 = sadd.s32 %s10, 1
    %s18 = ssub.s32 %s10, %s17
    %p19 = scmp.eq.s32.totalorder %s18, 0
    %s21 = sadd.s32 %s20, 1
    %s22 = scalar_select %p19, %s20, %s21
    %p25 = pneg %p19
    %p26 = scmp.eq.s32.totalorder %s10, 1
    %p27 = por %p25, %p26
    %p28 = scmp.ne.s32.totalorder %s20, %s23
    %p29 = scmp.eq.s32.totalorder %s10, 0
    %p30 = por %p28, %p29
    %p31 = scmp.ne.s32.totalorder %s20, %s23
    %p32 = scmp.eq.s32.totalorder %s15, 1
    %p33 = por %p31, %p32
    %p34 = scmp.ne.s32.totalorder %s23, %s24
    %p35 = scmp.eq.s32.totalorder %s15, 0
    %p36 = por %p34, %p35
    %p37 = scmp.ne.s32.totalorder %s23, %s24
    %p38 = scmp.eq.s32.totalorder %s16, 1
    %p39 = por %p37, %p38
    %p41 = scmp.ne.s32.totalorder %s24, %s40
    %p42 = scmp.eq.s32.totalorder %s16, 0
    %p43 = por %p41, %p42
    %s44 = ssub.s32 %s10, %s17
    %p45 = scmp.eq.s32.totalorder %s44, 0
    %s47 = sadd.s32 %s46, 1
    %s48 = scalar_select %p45, %s46, %s47
    %p51 = pneg %p45
    %p52 = scmp.eq.s32.totalorder %s10, 1
    %p53 = por %p51, %p52
    %p54 = scmp.ne.s32.totalorder %s46, %s49
    %p55 = scmp.eq.s32.totalorder %s10, 0
    %p56 = por %p54, %p55
    %p57 = scmp.ne.s32.totalorder %s46, %s49
    %p58 = scmp.eq.s32.totalorder %s15, 1
    %p59 = por %p57, %p58
    %p60 = scmp.ne.s32.totalorder %s49, %s50
    %p61 = scmp.eq.s32.totalorder %s15, 0
    %p62 = por %p60, %p61
    %p63 = scmp.ne.s32.totalorder %s49, %s50
    %p64 = scmp.eq.s32.totalorder %s16, 1
    %p65 = por %p63, %p64
    %p67 = scmp.ne.s32.totalorder %s50, %s66
    %p68 = scmp.eq.s32.totalorder %s16, 0
    %p69 = por %p67, %p68
    %s71 = sadd.s32 %s70, 1
    %p74 = scmp.eq.s32.totalorder %s10, 1
    %p75 = scmp.ne.s32.totalorder %s70, %s72
    %p76 = scmp.eq.s32.totalorder %s10, 0
    %p77 = por %p75, %p76
    %p78 = scmp.ne.s32.totalorder %s70, %s72
    %p79 = scmp.eq.s32.totalorder %s15, 1
    %p80 = por %p78, %p79
    %p81 = scmp.ne.s32.totalorder %s72, %s73
    %p82 = scmp.eq.s32.totalorder %s15, 0
    %p83 = por %p81, %p82
    %p84 = scmp.ne.s32.totalorder %s72, %s73
    %p85 = scmp.eq.s32.totalorder %s16, 1
    %p86 = por %p84, %p85
    %p88 = scmp.ne.s32.totalorder %s73, %s87
    %p89 = scmp.eq.s32.totalorder %s16, 0
    %p90 = por %p88, %p89
    %s92 = sadd.s32 %s91, 1
    %p95 = scmp.eq.s32.totalorder %s10, 1
    %p96 = scmp.ne.s32.totalorder %s91, %s93
    %p97 = scmp.eq.s32.totalorder %s10, 0
    %p98 = por %p96, %p97
    %p99 = scmp.ne.s32.totalorder %s91, %s93
    %p100 = scmp.eq.s32.totalorder %s15, 1
    %p101 = por %p99, %p100
    %p102 = scmp.ne.s32.totalorder %s93, %s94
    %p103 = scmp.eq.s32.totalorder %s15, 0
    %p104 = por %p102, %p103
    %p105 = scmp.ne.s32.totalorder %s93, %s94
    %p106 = scmp.eq.s32.totalorder %s16, 1
    %p107 = por %p105, %p106
    %p109 = scmp.ne.s32.totalorder %s94, %s108
    %p110 = scmp.eq.s32.totalorder %s16, 0
    %p111 = por %p109, %p110
    %s112 = ssub.s32 %s10, %s17
    %p113 = scmp.eq.s32.totalorder %s112, 0
    %s115 = sadd.s32 %s114, 1
    %s116 = scalar_select %p113, %s114, %s115
    %p119 = pneg %p113
    %p120 = scmp.eq.s32.totalorder %s10, 1
    %p121 = por %p119, %p120
    %p122 = scmp.ne.s32.totalorder %s114, %s117
    %p123 = scmp.eq.s32.totalorder %s10, 0
    %p124 = por %p122, %p123
    %p125 = scmp.ne.s32.totalorder %s114, %s117
    %p126 = scmp.eq.s32.totalorder %s15, 1
    %p127 = por %p125, %p126
    %p128 = scmp.ne.s32.totalorder %s117, %s118
    %p129 = scmp.eq.s32.totalorder %s15, 0
    %p130 = por %p128, %p129
    %p131 = scmp.ne.s32.totalorder %s117, %s118
    %p132 = scmp.eq.s32.totalorder %s16, 1
    %p133 = por %p131, %p132
    %p135 = scmp.ne.s32.totalorder %s118, %s134
    %p136 = scmp.eq.s32.totalorder %s16, 0
    %p137 = por %p135, %p136
    %p138 = scmp.le.s32.totalorder 1, %s10
    %p139 = scmp.lt.s32.totalorder %s10, 3
    %p140 = pnand %p138, %p139
    %p141 = pneg %p140
    // Predicated region
    $region9: #{basic_block_forward.5} parent=5 // pred_check
      _
    $region10: #{basic_block_forward.5} parent=5 // pred_check_branch
      %143 = sbr.rel (%p140) target = $region12
    $region11: #{basic_block_forward.5} parent=5 // pred_region
      %s144 = ssub.s32 %s10, 1
      // Predicated region
      $region13: #{basic_block_forward.5} parent=11 // pred_check
        %p145 = pneg %p83
      $region14: #{basic_block_forward.5} parent=11 // pred_check_branch
        %147 = sbr.rel (%p145) target = $region16
      $region15: #{basic_block_forward.5} parent=11 // pred_region
        _
      $region16: #{basic_block_forward.5} parent=11 // pred_fallthru
        _
      // Predicated region
      $region17: #{basic_block_forward.5} parent=11 // pred_check
        %p148 = pneg %p104
      $region18: #{basic_block_forward.5} parent=11 // pred_check_branch
        %150 = sbr.rel (%p148) target = $region20
      $region19: #{basic_block_forward.5} parent=11 // pred_region
        _
      $region20: #{basic_block_forward.5} parent=11 // pred_fallthru
        _
    $region12: #{basic_block_forward.5} parent=5 // pred_fallthru
      _
    %p151 = scmp.lt.s32.totalorder %s10, 2
    // Predicated region
    $region21: #{basic_block_forward.5} parent=5 // pred_check
      %p152 = pneg %p151
    $region22: #{basic_block_forward.5} parent=5 // pred_check_branch
      %154 = sbr.rel (%p152) target = $region24
    $region23: #{basic_block_forward.5} parent=5 // pred_region
      // Predicated region
      $region25: #{basic_block_forward.5} parent=23 // pred_check
        %p155 = pneg %p30
      $region26: #{basic_block_forward.5} parent=23 // pred_check_branch
        %157 = sbr.rel (%p155) target = $region28
      $region27: #{basic_block_forward.5} parent=23 // pred_region
        %p158 = scmp.lt.s32.totalorder %s10, 1
        %s159 = scalar_select %p158, %s10, 1
        %s160 = smul.addr %s159, 2
        %s161 = smul.addr %s160, 8
        %s162 = scalar_lea.vmem %s0, %s161
      $region28: #{basic_block_forward.5} parent=23 // pred_fallthru
        _
      // Predicated region
      $region29: #{basic_block_forward.5} parent=23 // pred_check
        %p163 = pneg %p56
      $region30: #{basic_block_forward.5} parent=23 // pred_check_branch
        %165 = sbr.rel (%p163) target = $region32
      $region31: #{basic_block_forward.5} parent=23 // pred_region
        %p166 = scmp.lt.s32.totalorder %s10, 1
        %s167 = scalar_select %p166, %s10, 1
        %s168 = smul.addr %s167, 2
        %s169 = smul.addr %s168, 8
        %s170 = scalar_lea.vmem %s1, %s169
      $region32: #{basic_block_forward.5} parent=23 // pred_fallthru
        _
    $region24: #{basic_block_forward.5} parent=5 // pred_fallthru
      _
    %p171 = scmp.le.s32.totalorder 1, %s10
    %p172 = scmp.lt.s32.totalorder %s10, 3
    %p173 = pnand %p171, %p172
    %p174 = pneg %p173
    // Predicated region
    $region33: #{basic_block_forward.5} parent=5 // pred_check
      _
    $region34: #{basic_block_forward.5} parent=5 // pred_check_branch
      %176 = sbr.rel (%p173) target = $region36
    $region35: #{basic_block_forward.5} parent=5 // pred_region
      %s177 = ssub.s32 %s10, 1
      %p178 = scmp.lt.s32.totalorder %s15, 1
      %s179 = scalar_select %p178, %s15, 1
      %s180 = smul.addr %s179, 2
      %s181 = smul.addr %s180, 8
      %s182 = scalar_lea.vmem %s0, %s181
      %p183 = pneg %p36
      %p184 = pneg %p33
      %p185 = scmp.lt.s32.totalorder %s15, 1
      %s186 = scalar_select %p185, %s15, 1
      %s187 = smul.addr %s186, 2
      %s188 = smul.addr %s187, 8
      %s189 = scalar_lea.vmem %s1, %s188
      %p190 = pneg %p62
      %p191 = pneg %p59
      %p192 = pneg %p83
      %p193 = pneg %p80
      %p194 = pneg %p104
      %p195 = pneg %p101
      %p196 = pneg %p130
      %p197 = pneg %p127
      %p198 = scmp.lt.s32.totalorder %s15, 1
      %s199 = scalar_select %p198, %s15, 1
      %s200 = smul.addr %s199, 2
      %s201 = smul.addr %s200, 8
      %s202 = scalar_lea.vmem %s4, %s201
      %p203 = scmp.lt.s32.totalorder %s15, 1
      %s204 = scalar_select %p203, %s15, 1
      %s205 = smul.addr %s204, 2
      %s206 = smul.addr %s205, 8
      %s207 = scalar_lea.vmem %s0, %s206
      %p208 = scmp.lt.s32.totalorder %s15, 1
      %s209 = scalar_select %p208, %s15, 1
      %s210 = smul.addr %s209, 2
      %s211 = smul.addr %s210, 8
      %s212 = scalar_lea.vmem %s1, %s211
      %p213 = scmp.lt.s32.totalorder %s15, 1
      %s214 = scalar_select %p213, %s15, 1
      %s215 = smul.addr %s214, 2
      %s216 = smul.addr %s215, 8
      %s217 = scalar_lea.vmem %s4, %s216
      %v218 = vld [vmem:[%s207] sm:$0xff]
      %v219 = vld [vmem:[%s207 + $0x8] sm:$0xff]
      %v220 = vld [vmem:[%s2] sm:$0x1]
      %v222 = vlaneseq
      %v223 = vshrl.u32 %v222, 7
      %v224 = vsub.s32 0, %v223
      %v225 = vrot.slane %v220, %v224
      %v227 = vmul.f32 %v218, %v225
      %v228 = vmul.f32 %v219, %v225
      %v229 = vld [vmem:[%s3] sm:$0x1]
      %v231 = vlaneseq
      %v232 = vshrl.u32 %v231, 7
      %v233 = vsub.s32 0, %v232
      %v234 = vrot.slane %v229, %v233
      %v236 = vadd.f32 %v227, %v234
      %v237 = vadd.f32 %v228, %v234
      %v238 = vld [vmem:[%s212] sm:$0xff]
      %v239 = vld [vmem:[%s212 + $0x8] sm:$0xff]
      %v240 = vadd.f32 %v236, %v238
      %v241 = vadd.f32 %v237, %v239
      %v242 = vmax.f32 %v240, 0.0
      %v243 = vmax.f32 %v241, 0.0
      %244 = vst [vmem:[%s217] sm:$0xff] %v242
      %245 = vst [vmem:[%s217 + $0x8] sm:$0xff] %v243
      %p246 = scmp.lt.s32.totalorder %s15, 1
      %s247 = scalar_select %p246, %s15, 1
      %s248 = smul.addr %s247, 2
      %s249 = smul.addr %s248, 8
      %s250 = scalar_lea.vmem %s4, %s249
      // Predicated region
      $region37: #{basic_block_forward.5} parent=35 // pred_check
        %p251 = pneg %p127
      $region38: #{basic_block_forward.5} parent=35 // pred_check_branch
        %253 = sbr.rel (%p251) target = $region40
      $region39: #{basic_block_forward.5} parent=35 // pred_region
        _
      $region40: #{basic_block_forward.5} parent=35 // pred_fallthru
        _
    $region36: #{basic_block_forward.5} parent=5 // pred_fallthru
      _
    %p254 = scmp.le.s32.totalorder 2, %s10
    // Predicated region
    $region41: #{basic_block_forward.5} parent=5 // pred_check
      %p255 = pneg %p254
    $region42: #{basic_block_forward.5} parent=5 // pred_check_branch
      %257 = sbr.rel (%p255) target = $region44
    $region43: #{basic_block_forward.5} parent=5 // pred_region
      %s258 = ssub.s32 %s10, 2
      // Predicated region
      $region45: #{basic_block_forward.5} parent=43 // pred_check
        %p259 = pneg %p133
      $region46: #{basic_block_forward.5} parent=43 // pred_check_branch
        %261 = sbr.rel (%p259) target = $region48
      $region47: #{basic_block_forward.5} parent=43 // pred_region
        %p262 = scmp.lt.s32.totalorder %s16, 1
        %s263 = scalar_select %p262, %s16, 1
        %s264 = smul.addr %s263, 2
        %s265 = smul.addr %s264, 8
        %s266 = scalar_lea.vmem %s4, %s265
      $region48: #{basic_block_forward.5} parent=43 // pred_fallthru
        _
    $region44: #{basic_block_forward.5} parent=5 // pred_fallthru
      _
  $region6: #{basic_block_forward.5} parent=0 // loop_footer
    %s14 = sadd.s32 1, %s10
  $region7: #{basic_block_forward.5} parent=0 // loop_footer_branch
    %9 = sbr.rel target = $region3
  $region8: #{basic_block_forward.5} parent=0 // loop_exit
    _

// kernel: basic_block_forward.4
$region0: #{basic_block_forward.4}
  #allocation0 [shape = 'u32[]', space=smem, size = 0x4, offset = 0x4, fixed_abs, tag = 'smem constant byte address 0x4 - core index']
  #allocation1 [shape = 'u32[144,128]{1,0:T(1,128)}', space=vmem, size = 0x12000, scoped, tag = 'internal scratch']
  #allocation2 [shape = 'f32[18,128]{1,0:T(8,128)}', space=vmem, size = 0x3000, scoped, tag = 'scratch operand']
  %s0 = inlined_call_operand.vmem [shape: f32[2,16,128], index: 0, kind: input, shape index: {}]
  %s1 = inlined_call_operand.vmem [shape: f32[1,128], index: 1, kind: input, shape index: {}]
  %s2 = inlined_call_operand.vmem [shape: f32[1,128], index: 2, kind: input, shape index: {}]
  %s3 = inlined_call_operand.vmem [shape: f32[3,128,128], index: 3, kind: input, shape index: {}]
  %s4 = inlined_call_operand.vmem [shape: f32[2,16,128], index: 4, kind: output, shape index: {0}]
  %s5 = inlined_call_operand.vmem [shape: f32[2,1,128], index: 5, kind: output, shape index: {1}]
  %s6 = inlined_call_operand.vmem [shape: f32[2,1,128], index: 6, kind: output, shape index: {2}]
  %7 = xla_tuple %s4, %s5, %s6
  %s8 = sld [smem:[#allocation0]]
  $region65: #{basic_block_forward.4} parent=0
    _
  %s10 = ssub.s32 1, %s8
  %s11 = scalar_select 0, %s10, %s8
  loop: start=0, step=1, limit=4
  $region2: #{basic_block_forward.4} parent=0 // loop_pre_header
    _
  $region3: #{basic_block_forward.4} parent=0 // loop_header
    %s13 = sphi 0, %s17
    %p14 = scmp.ge.s32.totalorder %s13, 4
    %s23 = sphi 0, %s25
    %s26 = sphi 0, %s23
    %s27 = sphi 0, %s26
    %s43 = sphi 0, %s27
    %s47 = sphi 0, %s47
    %s49 = sphi 0, %s47
    %s50 = sphi 0, %s49
    %s64 = sphi 0, %s50
    %s68 = sphi 0, %s68
    %s70 = sphi 0, %s68
    %s71 = sphi 0, %s70
    %s85 = sphi 0, %s71
    %s89 = sphi 0, %s89
    %s91 = sphi 0, %s89
    %s92 = sphi 0, %s91
    %s106 = sphi 0, %s92
    %s112 = sphi 0, %s114
    %s115 = sphi 0, %s112
    %s116 = sphi 0, %s115
    %s132 = sphi 0, %s116
    %s138 = sphi 0, %s140
    %s141 = sphi 0, %s138
    %s142 = sphi 0, %s141
    %s158 = sphi 0, %s142
    %s164 = sphi 0, %s166
    %s167 = sphi 0, %s164
    %s168 = sphi 0, %s167
    %s184 = sphi 0, %s168
  $region4: #{basic_block_forward.4} parent=0 // loop_header_branch
    %16 = sbr.rel (%p14) target = $region8
  $region5: #{basic_block_forward.4} parent=0 // loop_body
    %s18 = ssub.s32 %s13, 1
    %s19 = ssub.s32 %s13, 2
    %s20 = sadd.s32 %s13, 1
    %s21 = ssub.s32 %s13, %s20
    %p22 = scmp.eq.s32.totalorder %s21, 0
    %s24 = sadd.s32 %s23, 1
    %s25 = scalar_select %p22, %s23, %s24
    %p28 = pneg %p22
    %p29 = scmp.eq.s32.totalorder %s13, 1
    %p30 = por %p28, %p29
    %p31 = scmp.ne.s32.totalorder %s23, %s26
    %p32 = scmp.eq.s32.totalorder %s13, 0
    %p33 = por %p31, %p32
    %p34 = scmp.ne.s32.totalorder %s23, %s26
    %p35 = scmp.eq.s32.totalorder %s18, 1
    %p36 = por %p34, %p35
    %p37 = scmp.ne.s32.totalorder %s26, %s27
    %p38 = scmp.eq.s32.totalorder %s18, 0
    %p39 = por %p37, %p38
    %p40 = scmp.ne.s32.totalorder %s26, %s27
    %p41 = scmp.eq.s32.totalorder %s19, 1
    %p42 = por %p40, %p41
    %p44 = scmp.ne.s32.totalorder %s27, %s43
    %p45 = scmp.eq.s32.totalorder %s19, 0
    %p46 = por %p44, %p45
    %s48 = sadd.s32 %s47, 1
    %p51 = scmp.eq.s32.totalorder %s13, 1
    %p52 = scmp.ne.s32.totalorder %s47, %s49
    %p53 = scmp.eq.s32.totalorder %s13, 0
    %p54 = por %p52, %p53
    %p55 = scmp.ne.s32.totalorder %s47, %s49
    %p56 = scmp.eq.s32.totalorder %s18, 1
    %p57 = por %p55, %p56
    %p58 = scmp.ne.s32.totalorder %s49, %s50
    %p59 = scmp.eq.s32.totalorder %s18, 0
    %p60 = por %p58, %p59
    %p61 = scmp.ne.s32.totalorder %s49, %s50
    %p62 = scmp.eq.s32.totalorder %s19, 1
    %p63 = por %p61, %p62
    %p65 = scmp.ne.s32.totalorder %s50, %s64
    %p66 = scmp.eq.s32.totalorder %s19, 0
    %p67 = por %p65, %p66
    %s69 = sadd.s32 %s68, 1
    %p72 = scmp.eq.s32.totalorder %s13, 1
    %p73 = scmp.ne.s32.totalorder %s68, %s70
    %p74 = scmp.eq.s32.totalorder %s13, 0
    %p75 = por %p73, %p74
    %p76 = scmp.ne.s32.totalorder %s68, %s70
    %p77 = scmp.eq.s32.totalorder %s18, 1
    %p78 = por %p76, %p77
    %p79 = scmp.ne.s32.totalorder %s70, %s71
    %p80 = scmp.eq.s32.totalorder %s18, 0
    %p81 = por %p79, %p80
    %p82 = scmp.ne.s32.totalorder %s70, %s71
    %p83 = scmp.eq.s32.totalorder %s19, 1
    %p84 = por %p82, %p83
    %p86 = scmp.ne.s32.totalorder %s71, %s85
    %p87 = scmp.eq.s32.totalorder %s19, 0
    %p88 = por %p86, %p87
    %s90 = sadd.s32 %s89, 1
    %p93 = scmp.eq.s32.totalorder %s13, 1
    %p94 = scmp.ne.s32.totalorder %s89, %s91
    %p95 = scmp.eq.s32.totalorder %s13, 0
    %p96 = por %p94, %p95
    %p97 = scmp.ne.s32.totalorder %s89, %s91
    %p98 = scmp.eq.s32.totalorder %s18, 1
    %p99 = por %p97, %p98
    %p100 = scmp.ne.s32.totalorder %s91, %s92
    %p101 = scmp.eq.s32.totalorder %s18, 0
    %p102 = por %p100, %p101
    %p103 = scmp.ne.s32.totalorder %s91, %s92
    %p104 = scmp.eq.s32.totalorder %s19, 1
    %p105 = por %p103, %p104
    %p107 = scmp.ne.s32.totalorder %s92, %s106
    %p108 = scmp.eq.s32.totalorder %s19, 0
    %p109 = por %p107, %p108
    %s110 = ssub.s32 %s13, %s20
    %p111 = scmp.eq.s32.totalorder %s110, 0
    %s113 = sadd.s32 %s112, 1
    %s114 = scalar_select %p111, %s112, %s113
    %p117 = pneg %p111
    %p118 = scmp.eq.s32.totalorder %s13, 1
    %p119 = por %p117, %p118
    %p120 = scmp.ne.s32.totalorder %s112, %s115
    %p121 = scmp.eq.s32.totalorder %s13, 0
    %p122 = por %p120, %p121
    %p123 = scmp.ne.s32.totalorder %s112, %s115
    %p124 = scmp.eq.s32.totalorder %s18, 1
    %p125 = por %p123, %p124
    %p126 = scmp.ne.s32.totalorder %s115, %s116
    %p127 = scmp.eq.s32.totalorder %s18, 0
    %p128 = por %p126, %p127
    %p129 = scmp.ne.s32.totalorder %s115, %s116
    %p130 = scmp.eq.s32.totalorder %s19, 1
    %p131 = por %p129, %p130
    %p133 = scmp.ne.s32.totalorder %s116, %s132
    %p134 = scmp.eq.s32.totalorder %s19, 0
    %p135 = por %p133, %p134
    %s136 = ssub.s32 %s13, %s20
    %p137 = scmp.eq.s32.totalorder %s136, 0
    %s139 = sadd.s32 %s138, 1
    %s140 = scalar_select %p137, %s138, %s139
    %p143 = pneg %p137
    %p144 = scmp.eq.s32.totalorder %s13, 1
    %p145 = por %p143, %p144
    %p146 = scmp.ne.s32.totalorder %s138, %s141
    %p147 = scmp.eq.s32.totalorder %s13, 0
    %p148 = por %p146, %p147
    %p149 = scmp.ne.s32.totalorder %s138, %s141
    %p150 = scmp.eq.s32.totalorder %s18, 1
    %p151 = por %p149, %p150
    %p152 = scmp.ne.s32.totalorder %s141, %s142
    %p153 = scmp.eq.s32.totalorder %s18, 0
    %p154 = por %p152, %p153
    %p155 = scmp.ne.s32.totalorder %s141, %s142
    %p156 = scmp.eq.s32.totalorder %s19, 1
    %p157 = por %p155, %p156
    %p159 = scmp.ne.s32.totalorder %s142, %s158
    %p160 = scmp.eq.s32.totalorder %s19, 0
    %p161 = por %p159, %p160
    %s162 = ssub.s32 %s13, %s20
    %p163 = scmp.eq.s32.totalorder %s162, 0
    %s165 = sadd.s32 %s164, 1
    %s166 = scalar_select %p163, %s164, %s165
    %p169 = pneg %p163
    %p170 = scmp.eq.s32.totalorder %s13, 1
    %p171 = por %p169, %p170
    %p172 = scmp.ne.s32.totalorder %s164, %s167
    %p173 = scmp.eq.s32.totalorder %s13, 0
    %p174 = por %p172, %p173
    %p175 = scmp.ne.s32.totalorder %s164, %s167
    %p176 = scmp.eq.s32.totalorder %s18, 1
    %p177 = por %p175, %p176
    %p178 = scmp.ne.s32.totalorder %s167, %s168
    %p179 = scmp.eq.s32.totalorder %s18, 0
    %p180 = por %p178, %p179
    %p181 = scmp.ne.s32.totalorder %s167, %s168
    %p182 = scmp.eq.s32.totalorder %s19, 1
    %p183 = por %p181, %p182
    %p185 = scmp.ne.s32.totalorder %s168, %s184
    %p186 = scmp.eq.s32.totalorder %s19, 0
    %p187 = por %p185, %p186
    %p188 = scmp.le.s32.totalorder 1, %s13
    %p189 = scmp.lt.s32.totalorder %s13, 3
    %p190 = pnand %p188, %p189
    %p191 = pneg %p190
    // Predicated region
    $region9: #{basic_block_forward.4} parent=5 // pred_check
      _
    $region10: #{basic_block_forward.4} parent=5 // pred_check_branch
      %193 = sbr.rel (%p190) target = $region12
    $region11: #{basic_block_forward.4} parent=5 // pred_region
      %s194 = ssub.s32 %s13, 1
      // Predicated region
      $region13: #{basic_block_forward.4} parent=11 // pred_check
        %p195 = pneg %p60
      $region14: #{basic_block_forward.4} parent=11 // pred_check_branch
        %197 = sbr.rel (%p195) target = $region16
      $region15: #{basic_block_forward.4} parent=11 // pred_region
        _
      $region16: #{basic_block_forward.4} parent=11 // pred_fallthru
        _
      // Predicated region
      $region17: #{basic_block_forward.4} parent=11 // pred_check
        %p198 = pneg %p81
      $region18: #{basic_block_forward.4} parent=11 // pred_check_branch
        %200 = sbr.rel (%p198) target = $region20
      $region19: #{basic_block_forward.4} parent=11 // pred_region
        _
      $region20: #{basic_block_forward.4} parent=11 // pred_fallthru
        _
      // Predicated region
      $region21: #{basic_block_forward.4} parent=11 // pred_check
        %p201 = pneg %p102
      $region22: #{basic_block_forward.4} parent=11 // pred_check_branch
        %203 = sbr.rel (%p201) target = $region24
      $region23: #{basic_block_forward.4} parent=11 // pred_region
        _
      $region24: #{basic_block_forward.4} parent=11 // pred_fallthru
        _
    $region12: #{basic_block_forward.4} parent=5 // pred_fallthru
      _
    %p204 = scmp.lt.s32.totalorder %s13, 2
    // Predicated region
    $region25: #{basic_block_forward.4} parent=5 // pred_check
      %p205 = pneg %p204
    $region26: #{basic_block_forward.4} parent=5 // pred_check_branch
      %207 = sbr.rel (%p205) target = $region28
    $region27: #{basic_block_forward.4} parent=5 // pred_region
      // Predicated region
      $region29: #{basic_block_forward.4} parent=27 // pred_check
        %p208 = pneg %p33
      $region30: #{basic_block_forward.4} parent=27 // pred_check_branch
        %210 = sbr.rel (%p208) target = $region32
      $region31: #{basic_block_forward.4} parent=27 // pred_region
        %p211 = scmp.lt.s32.totalorder %s13, 1
        %s212 = scalar_select %p211, %s13, 1
        %s213 = smul.addr %s212, 2
        %s214 = smul.addr %s213, 8
        %s215 = scalar_lea.vmem %s0, %s214
      $region32: #{basic_block_forward.4} parent=27 // pred_fallthru
        _
    $region28: #{basic_block_forward.4} parent=5 // pred_fallthru
      _
    %p216 = scmp.le.s32.totalorder 1, %s13
    %p217 = scmp.lt.s32.totalorder %s13, 3
    %p218 = pnand %p216, %p217
    %p219 = pneg %p218
    // Predicated region
    $region33: #{basic_block_forward.4} parent=5 // pred_check
      _
    $region34: #{basic_block_forward.4} parent=5 // pred_check_branch
      %221 = sbr.rel (%p218) target = $region36
    $region35: #{basic_block_forward.4} parent=5 // pred_region
      %s222 = ssub.s32 %s13, 1
      %p223 = scmp.lt.s32.totalorder %s18, 1
      %s224 = scalar_select %p223, %s18, 1
      %s225 = smul.addr %s224, 2
      %s226 = smul.addr %s225, 8
      %s227 = scalar_lea.vmem %s0, %s226
      %p228 = pneg %p39
      %p229 = pneg %p36
      %p230 = pneg %p60
      %p231 = pneg %p57
      %p232 = pneg %p81
      %p233 = pneg %p78
      %p234 = pneg %p102
      %p235 = pneg %p99
      %p236 = pneg %p128
      %p237 = pneg %p125
      %p238 = scmp.lt.s32.totalorder %s18, 1
      %s239 = scalar_select %p238, %s18, 1
      %s240 = smul.addr %s239, 2
      %s241 = smul.addr %s240, 8
      %s242 = scalar_lea.vmem %s4, %s241
      %p243 = pneg %p154
      %p244 = pneg %p151
      %p245 = scmp.lt.s32.totalorder %s18, 1
      %s246 = scalar_select %p245, %s18, 1
      %s247 = scalar_lea.vmem %s5, %s246
      %p248 = pneg %p180
      %p249 = pneg %p177
      %p250 = scmp.lt.s32.totalorder %s18, 1
      %s251 = scalar_select %p250, %s18, 1
      %s252 = scalar_lea.vmem %s6, %s251
      %p253 = scmp.lt.s32.totalorder %s18, 1
      %s254 = scalar_select %p253, %s18, 1
      %s255 = smul.addr %s254, 2
      %s256 = smul.addr %s255, 8
      %s257 = scalar_lea.vmem %s0, %s256
      %p258 = scmp.lt.s32.totalorder %s18, 1
      %s259 = scalar_select %p258, %s18, 1
      %s260 = smul.addr %s259, 2
      %s261 = smul.addr %s260, 8
      %s262 = scalar_lea.vmem %s4, %s261
      %p263 = scmp.lt.s32.totalorder %s18, 1
      %s264 = scalar_select %p263, %s18, 1
      %s265 = scalar_lea.vmem %s5, %s264
      %p266 = scmp.lt.s32.totalorder %s18, 1
      %s267 = scalar_select %p266, %s18, 1
      %s268 = scalar_lea.vmem %s6, %s267
      %v269 = vld [vmem:[%s257] sm:$0xff]
      %v270 = vld [vmem:[%s257 + $0x8] sm:$0xff]
      %v271 = vld [vmem:[%s1] sm:$0x1]
      %v273 = vlaneseq
      %v274 = vshrl.u32 %v273, 7
      %v275 = vsub.s32 0, %v274
      %v276 = vrot.slane %v271, %v275
      %v278 = vmul.f32 %v269, %v276
      %v279 = vmul.f32 %v270, %v276
      %v280 = vld [vmem:[%s2] sm:$0x1]
      %v282 = vlaneseq
      %v283 = vshrl.u32 %v282, 7
      %v284 = vsub.s32 0, %v283
      %v285 = vrot.slane %v280, %v284
      %v287 = vadd.f32 %v278, %v285
      %v288 = vadd.f32 %v279, %v285
      %v289 = vmax.f32 %v287, 0.0
      %v290 = vmax.f32 %v288, 0.0
      %291 = vst [vmem:[#allocation2] sm:$0x1] 0.0
      %292 = vst [vmem:[#allocation2 + $0x11] sm:$0x1] 0.0
      %293 = vst [vmem:[#allocation2 + $0x1] sm:$0xff] %v289
      %294 = vst [vmem:[#allocation2 + $0x9] sm:$0xff] %v290
      %v295 = vld [vmem:[#allocation2] sm:$0xff]
      %v296 = vld [vmem:[#allocation2 + $0x8] sm:$0xff]
      %v297 = vld [vmem:[%s3] sm:$0xff]
      %v298 = vld [vmem:[%s3 + $0x8] sm:$0xff]
      %v299 = vld [vmem:[%s3 + $0x10] sm:$0xff]
      %v300 = vld [vmem:[%s3 + $0x18] sm:$0xff]
      %v301 = vld [vmem:[%s3 + $0x20] sm:$0xff]
      %v302 = vld [vmem:[%s3 + $0x28] sm:$0xff]
      %v303 = vld [vmem:[%s3 + $0x30] sm:$0xff]
      %v304 = vld [vmem:[%s3 + $0x38] sm:$0xff]
      %v305 = vld [vmem:[%s3 + $0x40] sm:$0xff]
      %v306 = vld [vmem:[%s3 + $0x48] sm:$0xff]
      %v307 = vld [vmem:[%s3 + $0x50] sm:$0xff]
      %v308 = vld [vmem:[%s3 + $0x58] sm:$0xff]
      %v309 = vld [vmem:[%s3 + $0x60] sm:$0xff]
      %v310 = vld [vmem:[%s3 + $0x68] sm:$0xff]
      %v311 = vld [vmem:[%s3 + $0x70] sm:$0xff]
      %v312 = vld [vmem:[%s3 + $0x78] sm:$0xff]
      %v313 = vld [vmem:[#allocation2 + $0x1] sm:$0xff]
      %v314 = vld [vmem:[#allocation2 + $0x9] sm:$0xff]
      %s315 = scalar_lea.vmem %s3, 128
      %v316 = vld [vmem:[%s315] sm:$0xff]
      %v317 = vld [vmem:[%s315 + $0x8] sm:$0xff]
      %v318 = vld [vmem:[%s315 + $0x10] sm:$0xff]
      %v319 = vld [vmem:[%s315 + $0x18] sm:$0xff]
      %v320 = vld [vmem:[%s315 + $0x20] sm:$0xff]
      %v321 = vld [vmem:[%s315 + $0x28] sm:$0xff]
      %v322 = vld [vmem:[%s315 + $0x30] sm:$0xff]
      %v323 = vld [vmem:[%s315 + $0x38] sm:$0xff]
      %v324 = vld [vmem:[%s315 + $0x40] sm:$0xff]
      %v325 = vld [vmem:[%s315 + $0x48] sm:$0xff]
      %v326 = vld [vmem:[%s315 + $0x50] sm:$0xff]
      %v327 = vld [vmem:[%s315 + $0x58] sm:$0xff]
      %v328 = vld [vmem:[%s315 + $0x60] sm:$0xff]
      %v329 = vld [vmem:[%s315 + $0x68] sm:$0xff]
      %v330 = vld [vmem:[%s315 + $0x70] sm:$0xff]
      %v331 = vld [vmem:[%s315 + $0x78] sm:$0xff]
      %332 = vmatprep.subr.mxu0 0.0
      %333 = vmatpush1.msra.mxu0 %v331
      %334 = vmatprep.subr.mxu0 0.0
      %335 = vmatpush1.msra.mxu0 %v330
      %336 = vmatprep.subr.mxu0 0.0
      %337 = vmatpush1.msra.mxu0 %v329
      %338 = vmatprep.subr.mxu0 0.0
      %339 = vmatpush1.msra.mxu0 %v328
      %340 = vmatprep.subr.mxu0 0.0
      %341 = vmatpush1.msra.mxu0 %v327
      %342 = vmatprep.subr.mxu0 0.0
      %343 = vmatpush1.msra.mxu0 %v326
      %344 = vmatprep.subr.mxu0 0.0
      %345 = vmatpush1.msra.mxu0 %v325
      %346 = vmatprep.subr.mxu0 0.0
      %347 = vmatpush1.msra.mxu0 %v324
      %348 = vmatprep.subr.mxu0 0.0
      %349 = vmatpush1.msra.mxu0 %v323
      %350 = vmatprep.subr.mxu0 0.0
      %351 = vmatpush1.msra.mxu0 %v322
      %352 = vmatprep.subr.mxu0 0.0
      %353 = vmatpush1.msra.mxu0 %v321
      %354 = vmatprep.subr.mxu0 0.0
      %355 = vmatpush1.msra.mxu0 %v320
      %356 = vmatprep.subr.mxu0 0.0
      %357 = vmatpush1.msra.mxu0 %v319
      %358 = vmatprep.subr.mxu0 0.0
      %359 = vmatpush1.msra.mxu0 %v318
      %360 = vmatprep.subr.mxu0 0.0
      %361 = vmatpush1.msra.mxu0 %v317
      %362 = vmatprep.subr.mxu0 0.0
      %363 = vmatpush1.msra.mxu0 %v316
      %364 = vmatprep.subr.mxu0 0.0
      %365 = vmatpush2.msra.mxu0 0.0
      %366 = vmatprep.subr.mxu0 0.0
      %367 = vmatpush2.msra.mxu0 0.0
      %368 = vmatprep.subr.mxu0 0.0
      %369 = vmatpush2.msra.mxu0 0.0
      %370 = vmatprep.subr.mxu0 0.0
      %371 = vmatpush2.msra.mxu0 0.0
      %372 = vmatprep.subr.mxu0 0.0
      %373 = vmatpush2.msra.mxu0 0.0
      %374 = vmatprep.subr.mxu0 0.0
      %375 = vmatpush2.msra.mxu0 0.0
      %376 = vmatprep.subr.mxu0 0.0
      %377 = vmatpush2.msra.mxu0 0.0
      %378 = vmatprep.subr.mxu0 0.0
      %379 = vmatpush2.msra.mxu0 0.0
      %380 = vmatprep.subr.mxu0 0.0
      %381 = vmatpush2.msra.mxu0 0.0
      %382 = vmatprep.subr.mxu0 0.0
      %383 = vmatpush2.msra.mxu0 0.0
      %384 = vmatprep.subr.mxu0 0.0
      %385 = vmatpush2.msra.mxu0 0.0
      %386 = vmatprep.subr.mxu0 0.0
      %387 = vmatpush2.msra.mxu0 0.0
      %388 = vmatprep.subr.mxu0 0.0
      %389 = vmatpush2.msra.mxu0 0.0
      %390 = vmatprep.subr.mxu0 0.0
      %391 = vmatpush2.msra.mxu0 0.0
      %392 = vmatprep.subr.mxu0 0.0
      %393 = vmatpush2.msra.mxu0 0.0
      %394 = vmatprep.subr.mxu0 0.0
      %395 = vmatpush2.msra.mxu0 0.0
      %396 = vmatprep.mubr.f32.mxu0 0.0
      %397 = vmatmul.mubr.f32.gmra.mxu0 %v313
      %v398 = vpop.f32.mrf.mxu0
      %v399 = vadd.f32 0.0, %v398
      %v400 = vpop.f32.mrf.mxu0
      %401 = vmatprep.mubr.f32.mxu0 0.0
      %402 = vmatmul.mubr.f32.gmra.mxu0 %v314
      %v403 = vpop.f32.mrf.mxu0
      %v404 = vadd.f32 0.0, %v403
      %v405 = vpop.f32.mrf.mxu0
      %406 = vdwg.mxu0
      %407 = vmatprep.subr.mxu0 0.0
      %408 = vmatpush1.msra.mxu0 %v312
      %409 = vmatprep.subr.mxu0 0.0
      %410 = vmatpush1.msra.mxu0 %v311
      %411 = vmatprep.subr.mxu0 0.0
      %412 = vmatpush1.msra.mxu0 %v310
      %413 = vmatprep.subr.mxu0 0.0
      %414 = vmatpush1.msra.mxu0 %v309
      %415 = vmatprep.subr.mxu0 0.0
      %416 = vmatpush1.msra.mxu0 %v308
      %417 = vmatprep.subr.mxu0 0.0
      %418 = vmatpush1.msra.mxu0 %v307
      %419 = vmatprep.subr.mxu0 0.0
      %420 = vmatpush1.msra.mxu0 %v306
      %421 = vmatprep.subr.mxu0 0.0
      %422 = vmatpush1.msra.mxu0 %v305
      %423 = vmatprep.subr.mxu0 0.0
      %424 = vmatpush1.msra.mxu0 %v304
      %425 = vmatprep.subr.mxu0 0.0
      %426 = vmatpush1.msra.mxu0 %v303
      %427 = vmatprep.subr.mxu0 0.0
      %428 = vmatpush1.msra.mxu0 %v302
      %429 = vmatprep.subr.mxu0 0.0
      %430 = vmatpush1.msra.mxu0 %v301
      %431 = vmatprep.subr.mxu0 0.0
      %432 = vmatpush1.msra.mxu0 %v300
      %433 = vmatprep.subr.mxu0 0.0
      %434 = vmatpush1.msra.mxu0 %v299
      %435 = vmatprep.subr.mxu0 0.0
      %436 = vmatpush1.msra.mxu0 %v298
      %437 = vmatprep.subr.mxu0 0.0
      %438 = vmatpush1.msra.mxu0 %v297
      %439 = vmatprep.subr.mxu0 0.0
      %440 = vmatpush2.msra.mxu0 0.0
      %441 = vmatprep.subr.mxu0 0.0
      %442 = vmatpush2.msra.mxu0 0.0
      %443 = vmatprep.subr.mxu0 0.0
      %444 = vmatpush2.msra.mxu0 0.0
      %445 = vmatprep.subr.mxu0 0.0
      %446 = vmatpush2.msra.mxu0 0.0
      %447 = vmatprep.subr.mxu0 0.0
      %448 = vmatpush2.msra.mxu0 0.0
      %449 = vmatprep.subr.mxu0 0.0
      %450 = vmatpush2.msra.mxu0 0.0
      %451 = vmatprep.subr.mxu0 0.0
      %452 = vmatpush2.msra.mxu0 0.0
      %453 = vmatprep.subr.mxu0 0.0
      %454 = vmatpush2.msra.mxu0 0.0
      %455 = vmatprep.subr.mxu0 0.0
      %456 = vmatpush2.msra.mxu0 0.0
      %457 = vmatprep.subr.mxu0 0.0
      %458 = vmatpush2.msra.mxu0 0.0
      %459 = vmatprep.subr.mxu0 0.0
      %460 = vmatpush2.msra.mxu0 0.0
      %461 = vmatprep.subr.mxu0 0.0
      %462 = vmatpush2.msra.mxu0 0.0
      %463 = vmatprep.subr.mxu0 0.0
      %464 = vmatpush2.msra.mxu0 0.0
      %465 = vmatprep.subr.mxu0 0.0
      %466 = vmatpush2.msra.mxu0 0.0
      %467 = vmatprep.subr.mxu0 0.0
      %468 = vmatpush2.msra.mxu0 0.0
      %469 = vmatprep.subr.mxu0 0.0
      %470 = vmatpush2.msra.mxu0 0.0
      %471 = vmatprep.mubr.f32.mxu0 0.0
      %472 = vmatmul.mubr.f32.gmra.mxu0 %v295
      %v473 = vpop.f32.mrf.mxu0
      %v474 = vadd.f32 %v399, %v473
      %v475 = vpop.f32.mrf.mxu0
      %476 = vmatprep.mubr.f32.mxu0 0.0
      %477 = vmatmul.mubr.f32.gmra.mxu0 %v296
      %v478 = vpop.f32.mrf.mxu0
      %v479 = vadd.f32 %v404, %v478
      %v480 = vpop.f32.mrf.mxu0
      %481 = vdwg.mxu0
      %v482 = vld [vmem:[#allocation2 + $0x2] sm:$0xff]
      %v483 = vld [vmem:[#allocation2 + $0xa] sm:$0xff]
      %s484 = scalar_lea.vmem %s3, 256
      %v485 = vld [vmem:[%s484] sm:$0xff]
      %v486 = vld [vmem:[%s484 + $0x8] sm:$0xff]
      %v487 = vld [vmem:[%s484 + $0x10] sm:$0xff]
      %v488 = vld [vmem:[%s484 + $0x18] sm:$0xff]
      %v489 = vld [vmem:[%s484 + $0x20] sm:$0xff]
      %v490 = vld [vmem:[%s484 + $0x28] sm:$0xff]
      %v491 = vld [vmem:[%s484 + $0x30] sm:$0xff]
      %v492 = vld [vmem:[%s484 + $0x38] sm:$0xff]
      %v493 = vld [vmem:[%s484 + $0x40] sm:$0xff]
      %v494 = vld [vmem:[%s484 + $0x48] sm:$0xff]
      %v495 = vld [vmem:[%s484 + $0x50] sm:$0xff]
      %v496 = vld [vmem:[%s484 + $0x58] sm:$0xff]
      %v497 = vld [vmem:[%s484 + $0x60] sm:$0xff]
      %v498 = vld [vmem:[%s484 + $0x68] sm:$0xff]
      %v499 = vld [vmem:[%s484 + $0x70] sm:$0xff]
      %v500 = vld [vmem:[%s484 + $0x78] sm:$0xff]
      %501 = vmatprep.subr.mxu0 0.0
      %502 = vmatpush1.msra.mxu0 %v500
      %503 = vmatprep.subr.mxu0 0.0
      %504 = vmatpush1.msra.mxu0 %v499
      %505 = vmatprep.subr.mxu0 0.0
      %506 = vmatpush1.msra.mxu0 %v498
      %507 = vmatprep.subr.mxu0 0.0
      %508 = vmatpush1.msra.mxu0 %v497
      %509 = vmatprep.subr.mxu0 0.0
      %510 = vmatpush1.msra.mxu0 %v496
      %511 = vmatprep.subr.mxu0 0.0
      %512 = vmatpush1.msra.mxu0 %v495
      %513 = vmatprep.subr.mxu0 0.0
      %514 = vmatpush1.msra.mxu0 %v494
      %515 = vmatprep.subr.mxu0 0.0
      %516 = vmatpush1.msra.mxu0 %v493
      %517 = vmatprep.subr.mxu0 0.0
      %518 = vmatpush1.msra.mxu0 %v492
      %519 = vmatprep.subr.mxu0 0.0
      %520 = vmatpush1.msra.mxu0 %v491
      %521 = vmatprep.subr.mxu0 0.0
      %522 = vmatpush1.msra.mxu0 %v490
      %523 = vmatprep.subr.mxu0 0.0
      %524 = vmatpush1.msra.mxu0 %v489
      %525 = vmatprep.subr.mxu0 0.0
      %526 = vmatpush1.msra.mxu0 %v488
      %527 = vmatprep.subr.mxu0 0.0
      %528 = vmatpush1.msra.mxu0 %v487
      %529 = vmatprep.subr.mxu0 0.0
      %530 = vmatpush1.msra.mxu0 %v486
      %531 = vmatprep.subr.mxu0 0.0
      %532 = vmatpush1.msra.mxu0 %v485
      %533 = vmatprep.subr.mxu0 0.0
      %534 = vmatpush2.msra.mxu0 0.0
      %535 = vmatprep.subr.mxu0 0.0
      %536 = vmatpush2.msra.mxu0 0.0
      %537 = vmatprep.subr.mxu0 0.0
      %538 = vmatpush2.msra.mxu0 0.0
      %539 = vmatprep.subr.mxu0 0.0
      %540 = vmatpush2.msra.mxu0 0.0
      %541 = vmatprep.subr.mxu0 0.0
      %542 = vmatpush2.msra.mxu0 0.0
      %543 = vmatprep.subr.mxu0 0.0
      %544 = vmatpush2.msra.mxu0 0.0
      %545 = vmatprep.subr.mxu0 0.0
      %546 = vmatpush2.msra.mxu0 0.0
      %547 = vmatprep.subr.mxu0 0.0
      %548 = vmatpush2.msra.mxu0 0.0
      %549 = vmatprep.subr.mxu0 0.0
      %550 = vmatpush2.msra.mxu0 0.0
      %551 = vmatprep.subr.mxu0 0.0
      %552 = vmatpush2.msra.mxu0 0.0
      %553 = vmatprep.subr.mxu0 0.0
      %554 = vmatpush2.msra.mxu0 0.0
      %555 = vmatprep.subr.mxu0 0.0
      %556 = vmatpush2.msra.mxu0 0.0
      %557 = vmatprep.subr.mxu0 0.0
      %558 = vmatpush2.msra.mxu0 0.0
      %559 = vmatprep.subr.mxu0 0.0
      %560 = vmatpush2.msra.mxu0 0.0
      %561 = vmatprep.subr.mxu0 0.0
      %562 = vmatpush2.msra.mxu0 0.0
      %563 = vmatprep.subr.mxu0 0.0
      %564 = vmatpush2.msra.mxu0 0.0
      %565 = vmatprep.mubr.f32.mxu0 0.0
      %566 = vmatmul.mubr.f32.gmra.mxu0 %v482
      %v567 = vpop.f32.mrf.mxu0
      %v568 = vadd.f32 0.0, %v567
      %v569 = vpop.f32.mrf.mxu0
      %570 = vmatprep.mubr.f32.mxu0 0.0
      %571 = vmatmul.mubr.f32.gmra.mxu0 %v483
      %v572 = vpop.f32.mrf.mxu0
      %v573 = vadd.f32 0.0, %v572
      %v574 = vpop.f32.mrf.mxu0
      %575 = vdwg.mxu0
      %v576 = vadd.f32 %v474, %v568
      %v577 = vadd.f32 %v479, %v573
      %578 = vst [vmem:[%s262] sm:$0xff] %v576
      %579 = vst [vmem:[%s262 + $0x8] sm:$0xff] %v577
      %v580 = vadd.f32 %v576, %v577
      %v581 = vrot.slane %v580, 4
      %v582 = vadd.f32 %v580, %v581
      %v583 = vrot.slane %v582, 2
      %v584 = vadd.f32 %v582, %v583
      %v585 = vrot.slane %v584, 1
      %v586 = vadd.f32 %v584, %v585
      %587 = vst [vmem:[%s265] sm:$0x1] %v586
      %v588 = vmul.f32 %v576, %v576
      %v589 = vmul.f32 %v577, %v577
      %v590 = vadd.f32 %v588, %v589
      %v591 = vrot.slane %v590, 4
      %v592 = vadd.f32 %v590, %v591
      %v593 = vrot.slane %v592, 2
      %v594 = vadd.f32 %v592, %v593
      %v595 = vrot.slane %v594, 1
      %v596 = vadd.f32 %v594, %v595
      %597 = vst [vmem:[%s268] sm:$0x1] %v596
      %p598 = scmp.lt.s32.totalorder %s18, 1
      %s599 = scalar_select %p598, %s18, 1
      %s600 = smul.addr %s599, 2
      %s601 = smul.addr %s600, 8
      %s602 = scalar_lea.vmem %s4, %s601
      %p603 = scmp.lt.s32.totalorder %s18, 1
      %s604 = scalar_select %p603, %s18, 1
      %s605 = scalar_lea.vmem %s5, %s604
      %p606 = scmp.lt.s32.totalorder %s18, 1
      %s607 = scalar_select %p606, %s18, 1
      %s608 = scalar_lea.vmem %s6, %s607
      // Predicated region
      $region37: #{basic_block_forward.4} parent=35 // pred_check
        %p609 = pneg %p125
      $region38: #{basic_block_forward.4} parent=35 // pred_check_branch
        %611 = sbr.rel (%p609) target = $region40
      $region39: #{basic_block_forward.4} parent=35 // pred_region
        _
      $region40: #{basic_block_forward.4} parent=35 // pred_fallthru
        _
      // Predicated region
      $region41: #{basic_block_forward.4} parent=35 // pred_check
        %p612 = pneg %p151
      $region42: #{basic_block_forward.4} parent=35 // pred_check_branch
        %614 = sbr.rel (%p612) target = $region44
      $region43: #{basic_block_forward.4} parent=35 // pred_region
        _
      $region44: #{basic_block_forward.4} parent=35 // pred_fallthru
        _
      // Predicated region
      $region45: #{basic_block_forward.4} parent=35 // pred_check
        %p615 = pneg %p177
      $region46: #{basic_block_forward.4} parent=35 // pred_check_branch
        %617 = sbr.rel (%p615) target = $region48
      $region47: #{basic_block_forward.4} parent=35 // pred_region
        _
      $region48: #{basic_block_forward.4} parent=35 // pred_fallthru
        _
    $region36: #{basic_block_forward.4} parent=5 // pred_fallthru
      _
    %p618 = scmp.le.s32.totalorder 2, %s13
    // Predicated region
    $region49: #{basic_block_forward.4} parent=5 // pred_check
      %p619 = pneg %p618
    $region50: #{basic_block_forward.4} parent=5 // pred_check_branch
      %621 = sbr.rel (%p619) target = $region52
    $region51: #{basic_block_forward.4} parent=5 // pred_region
      %s622 = ssub.s32 %s13, 2
      // Predicated region
      $region53: #{basic_block_forward.4} parent=51 // pred_check
        %p623 = pneg %p131
      $region54: #{basic_block_forward.4} parent=51 // pred_check_branch
        %625 = sbr.rel (%p623) target = $region56
      $region55: #{basic_block_forward.4} parent=51 // pred_region
        %p626 = scmp.lt.s32.totalorder %s19, 1
        %s627 = scalar_select %p626, %s19, 1
        %s628 = smul.addr %s627, 2
        %s629 = smul.addr %s628, 8
        %s630 = scalar_lea.vmem %s4, %s629
      $region56: #{basic_block_forward.4} parent=51 // pred_fallthru
        _
      // Predicated region
      $region57: #{basic_block_forward.4} parent=51 // pred_check
        %p631 = pneg %p157
      $region58: #{basic_block_forward.4} parent=51 // pred_check_branch
        %633 = sbr.rel (%p631) target = $region60
      $region59: #{basic_block_forward.4} parent=51 // pred_region
        %p634 = scmp.lt.s32.totalorder %s19, 1
        %s635 = scalar_select %p634, %s19, 1
        %s636 = scalar_lea.vmem %s5, %s635
      $region60: #{basic_block_forward.4} parent=51 // pred_fallthru
        _
      // Predicated region
      $region61: #{basic_block_forward.4} parent=51 // pred_check
        %p637 = pneg %p183
      $region62: #{basic_block_forward.4} parent=51 // pred_check_branch
        %639 = sbr.rel (%p637) target = $region64
      $region63: #{basic_block_forward.4} parent=51 // pred_region
        %p640 = scmp.lt.s32.totalorder %s19, 1
        %s641 = scalar_select %p640, %s19, 1
        %s642 = scalar_lea.vmem %s6, %s641
      $region64: #{basic_block_forward.4} parent=51 // pred_fallthru
        _
    $region52: #{basic_block_forward.4} parent=5 // pred_fallthru
      _
  $region6: #{basic_block_forward.4} parent=0 // loop_footer
    %s17 = sadd.s32 1, %s13
  $region7: #{basic_block_forward.4} parent=0 // loop_footer_branch
    %12 = sbr.rel target = $region3
  $region8: #{basic_block_forward.4} parent=0 // loop_exit
    _

</llo_original>
